<compile_context>
chip_gen: v7x
topology: tpu7x:2x2x1
jax: 0.10.0
libtpu: 0.0.40
codegen_flags: <defaults>
</compile_context>

<pallas_src>
import jax
import jax.numpy as jnp
import numpy as np
from jax.experimental import pallas as pl
from jax.experimental.pallas import tpu as pltpu

BN_EPS = 1e-5


# ----------------------------------------------------------------------------
# Fused MobBlock kernel: one grid step = `batch_block` images, all intermediates in VMEM.
# ----------------------------------------------------------------------------
def _mobblock_kernel(patches_ref, w0_ref, b0_ref,
                     wd1_ref, bd1_ref, wp1_ref, bp1_ref,
                     wd2_ref, bd2_ref, wp2_ref, bp2_ref,
                     wd3_ref, bd3_ref, wp3_ref, bp3_ref,
                     o_ref,
                     pad1_ref, pad2_ref, pad3_ref):
    B, Hd, Wd, _ = o_ref.shape

    # ---- stage 0: 3x3 / stride-2 conv (+ folded BN + ReLU) as one MXU matmul over im2col ----
    pm = patches_ref[...]                                   # (B, Hd*Wd, 27)
    c0 = w0_ref.shape[1]
    m0 = pm.reshape(B * Hd * Wd, pm.shape[-1])              # free: Hd*Wd is a multiple of 8
    y0 = jnp.dot(m0.astype(w0_ref.dtype), w0_ref[...],
                 preferred_element_type=jnp.float32)        # (B*Hd*Wd, 32)
    y0 = jnp.maximum(y0 + b0_ref[...], 0.0)
    y = y0.reshape(B, Hd, Wd, c0)

    # ---- conv_dw: depthwise 3x3 (+BN+ReLU) then pointwise 1x1 (+BN+ReLU) ----
    def dw_pw(x, pad_ref, wd_ref, bd_ref, wp_ref, bp_ref):
        Bx, H, W, C = x.shape
        Hp = H + 2

        # Row-only halo scratch: H is not a tiled (sublane/lane) axis, so all stores/loads
        # below are aligned.  Only the 2 halo rows are zeroed; interior is fully overwritten.
        zrow = jnp.zeros((Bx, 1, W, C), jnp.float32)
        pad_ref[:, 0:1, :, :] = zrow
        pad_ref[:, Hp - 1:Hp, :, :] = zrow
        pad_ref[:, 1:H + 1, :, :] = x
        xp = pad_ref[...]                                   # (B, H+2, W, C)

        # Column-shifted taps via XLU sublane rotation + edge masks (no misaligned W slices).
        col = jax.lax.broadcasted_iota(jnp.int32, (1, W, 1), 1)
        mask_l = (col > 0).astype(jnp.float32)              # zero wrapped col 0   (w-1 tap)
        mask_r = (col < W - 1).astype(jnp.float32)          # zero wrapped col W-1 (w+1 tap)
        xp3 = xp.reshape(Bx * Hp, W, C)                     # free: leading dims only
        xl = (pltpu.roll(xp3, 1, axis=1) * mask_l).reshape(Bx, Hp, W, C)      # holds x[w-1]
        xr = (pltpu.roll(xp3, W - 1, axis=1) * mask_r).reshape(Bx, Hp, W, C)  # holds x[w+1]

        wd = wd_ref[...]                                    # (9, C), BN scale pre-folded
        acc = jnp.zeros((Bx, H, W, C), jnp.float32)
        for kh in range(3):                                 # kh shifts are free row offsets
            acc = acc + xl[:, kh:kh + H] * wd[kh * 3 + 0:kh * 3 + 1]
            acc = acc + xp[:, kh:kh + H] * wd[kh * 3 + 1:kh * 3 + 2]
            acc = acc + xr[:, kh:kh + H] * wd[kh * 3 + 2:kh * 3 + 3]
        z = jnp.maximum(acc + bd_ref[...], 0.0)             # (B, H, W, C)

        # pointwise 1x1 conv: batch folded into M of the MXU matmul, f32 accumulation.
        cout = wp_ref.shape[1]
        zm = z.reshape(Bx * H * W, C)                       # free: W is a multiple of 8
        m = jnp.dot(zm.astype(wp_ref.dtype), wp_ref[...],
                    preferred_element_type=jnp.float32)
        m = jnp.maximum(m + bp_ref[...], 0.0)
        return m.reshape(Bx, H, W, cout)

    y = dw_pw(y, pad1_ref, wd1_ref, bd1_ref, wp1_ref, bp1_ref)    # (B, Hd, Wd, 64)
    y = dw_pw(y, pad2_ref, wd2_ref, bd2_ref, wp2_ref, bp2_ref)    # (B, Hd, Wd, 128)
    y = dw_pw(y, pad3_ref, wd3_ref, bd3_ref, wp3_ref, bp3_ref)    # (B, Hd, Wd, 128)

    o_ref[...] = y.astype(o_ref.dtype)


# ----------------------------------------------------------------------------
# Wrapper: NCHW in/out, im2col prep for the stride-2 conv, single pallas_call.
# ----------------------------------------------------------------------------
def mobblock_forward(x_nchw, p, batch_block=1):
    N, Cin, H, W = x_nchw.shape
    assert H % 2 == 0 and W % 2 == 0, "MobBlock(ind=0) kernel assumes even spatial dims"
    assert N % batch_block == 0
    B = batch_block
    Hd, Wd = H // 2, W // 2
    assert Wd % 8 == 0, "Wd must be a multiple of 8 for layout-preserving reshapes"
    c1 = p['wd1'].shape[1]        # 32  (depthwise channels of conv_dw 1)
    c2 = p['wd2'].shape[1]        # 64
    c3 = p['wd3'].shape[1]        # 128
    cout = p['wp3'].shape[1]      # 128

    # im2col for the stride-2 3x3 conv: (N, Hd*Wd, 27), tap order (kh, kw, ci) matches w0.
    x = jnp.transpose(x_nchw, (0, 2, 3, 1))                           # NCHW -> NHWC
    xp = jnp.pad(x, ((0, 0), (1, 1), (1, 1), (0, 0)))                 # (N, H+2, W+2, Cin)
    taps = [xp[:, kh:kh + 2 * Hd:2, kw:kw + 2 * Wd:2, :]
            for kh in range(3) for kw in range(3)]                    # each (N, Hd, Wd, Cin)
    patches = jnp.stack(taps, axis=3).reshape(N, Hd * Wd, 9 * Cin)    # (N, Hd*Wd, 27)
    patches = patches.astype(p['w0'].dtype)

    w_args = (p['w0'], p['b0'],
              p['wd1'], p['bd1'], p['wp1'], p['bp1'],
              p['wd2'], p['bd2'], p['wp2'], p['bp2'],
              p['wd3'], p['bd3'], p['wp3'], p['bp3'])

    def _whole(a):                                                    # small 2-D weight/bias
        return pl.BlockSpec(a.shape, lambda n: (0, 0))

    # Advisory cost estimate (helps XLA schedule the surrounding transposes / im2col shuffle).
    hw = Hd * Wd
    flops = 2 * N * hw * p['w0'].shape[0] * p['w0'].shape[1]
    for i in (1, 2, 3):
        flops += 2 * 9 * N * hw * p[f'wd{i}'].shape[1]
        flops += 2 * N * hw * p[f'wp{i}'].shape[0] * p[f'wp{i}'].shape[1]
    bytes_accessed = (patches.size * patches.dtype.itemsize
                      + N * hw * cout * 4
                      + sum(int(a.size) * a.dtype.itemsize for a in w_args))
    cost = pl.CostEstimate(flops=int(flops), transcendentals=0,
                           bytes_accessed=int(bytes_accessed))

    out = pl.pallas_call(
        _mobblock_kernel,
        grid=(N // B,),
        out_shape=jax.ShapeDtypeStruct((N, Hd, Wd, cout), jnp.float32),
        in_specs=([pl.BlockSpec((B, Hd * Wd, 9 * Cin), lambda n: (n, 0, 0))]
                  + [_whole(a) for a in w_args]),
        out_specs=pl.BlockSpec((B, Hd, Wd, cout), lambda n: (n, 0, 0, 0)),
        scratch_shapes=[
            pltpu.VMEM((B, Hd + 2, Wd, c1), jnp.float32),
            pltpu.VMEM((B, Hd + 2, Wd, c2), jnp.float32),
            pltpu.VMEM((B, Hd + 2, Wd, c3), jnp.float32),
        ],
        compiler_params=pltpu.CompilerParams(
            dimension_semantics=("parallel",),
            vmem_limit_bytes=32 * 1024 * 1024),
        cost_estimate=cost,
    )(patches, *w_args)

    return jnp.transpose(out, (0, 3, 1, 2))                           # NHWC -> NCHW


# ----------------------------------------------------------------------------
# Deterministic parameter init (PyTorch layouts) and fold/convert to kernel layouts.
# ----------------------------------------------------------------------------
def _make_bn_raw(c, off):
    i = jnp.arange(c, dtype=jnp.float32)
    gamma = 1.0 + 0.01 * i + 0.001 * off
    beta = 0.02 * i - 0.01 * off
    mean = 0.001 * i
    var = 1.0 + 0.002 * i
    return gamma, beta, mean, var


def _fold_bn(gamma, beta, mean, var):
    s = gamma / jnp.sqrt(var + BN_EPS)
    return s, beta - mean * s


def init_mobblock0_raw(key):
    ks = jax.random.split(key, 7)
    raw = {'w0': jax.random.normal(ks[0], (32, 3, 3, 3), jnp.float32) * 0.1,
           'bn0': _make_bn_raw(32, 0)}
    specs = [(32, 64), (64, 128), (128, 128)]
    for i, (cin, cout) in enumerate(specs, start=1):
        raw[f'dw{i}'] = jax.random.normal(ks[2 * i - 1], (cin, 1, 3, 3), jnp.float32) * 0.1
        raw[f'bn{i}a'] = _make_bn_raw(cin, i)
        raw[f'pw{i}'] = jax.random.normal(ks[2 * i], (cout, cin, 1, 1), jnp.float32) * 0.1
        raw[f'bn{i}b'] = _make_bn_raw(cout, i + 10)
    return raw


def convert_params(raw, matmul_dtype=jnp.float32):
    """Fold BN scale into conv weights; convert to kernel layouts.

    matmul_dtype=jnp.bfloat16 feeds bf16 operands to the MXU (v6e/v7x native) while the
    kernel keeps f32 accumulation; default f32 preserves the 2e-3 reference tolerance.
    """
    p = {}
    s0, b0 = _fold_bn(*raw['bn0'])
    w0 = jnp.transpose(raw['w0'], (2, 3, 1, 0)) * s0                  # OIHW -> HWIO, scale Cout
    p['w0'] = w0.reshape(-1, w0.shape[-1]).astype(matmul_dtype)       # (27, 32)
    p['b0'] = b0.reshape(1, -1)
    for i in (1, 2, 3):
        sa, ba = _fold_bn(*raw[f'bn{i}a'])
        dw = jnp.transpose(raw[f'dw{i}'][:, 0], (1, 2, 0)) * sa       # (3,3,C) scaled
        p[f'wd{i}'] = dw.reshape(9, -1)                               # (9, C)
        p[f'bd{i}'] = ba.reshape(1, -1)
        sb, bb = _fold_bn(*raw[f'bn{i}b'])
        pw = jnp.transpose(raw[f'pw{i}'][:, :, 0, 0], (1, 0)) * sb    # (Cin, Cout) scaled
        p[f'wp{i}'] = pw.astype(matmul_dtype)
        p[f'bp{i}'] = bb.reshape(1, -1)
    return p


# ----------------------------------------------------------------------------
# Pure-JAX reference (lax convs, PyTorch padding semantics) for verification.
# ----------------------------------------------------------------------------
def ref_forward(x_nchw, raw):
    def conv(x, w, stride, pad, groups=1):
        return jax.lax.conv_general_dilated(
            x, w, (stride, stride), ((pad, pad), (pad, pad)),
            dimension_numbers=('NCHW', 'OIHW', 'NCHW'),
            feature_group_count=groups)

    def bn_relu(x, bn):
        gamma, beta, mean, var = bn
        s = gamma / jnp.sqrt(var + BN_EPS)
        b = beta - mean * s
        return jnp.maximum(x * s[None, :, None, None] + b[None, :, None, None], 0.0)

    x = bn_relu(conv(x_nchw, raw['w0'], 2, 1), raw['bn0'])
    for i in (1, 2, 3):
        c = raw[f'dw{i}'].shape[0]
        x = bn_relu(conv(x, raw[f'dw{i}'], 1, 1, groups=c), raw[f'bn{i}a'])
        x = bn_relu(conv(x, raw[f'pw{i}'], 1, 0), raw[f'bn{i}b'])
    return x


if __name__ == "__main__":
    key = jax.random.PRNGKey(0)
    kx, kp = jax.random.split(key)
    x = jax.random.normal(kx, (2, 3, 16, 16), jnp.float32)            # NCHW, PyTorch convention

    raw = init_mobblock0_raw(kp)
    params = convert_params(raw)                                      # f32 MXU operands (default)

    out = jax.jit(lambda v: mobblock_forward(v, params))(x)
    out = jax.block_until_ready(out)

    assert out.shape == (2, 128, 8, 8), out.shape
    ref = ref_forward(x, raw)
    np.testing.assert_allclose(np.asarray(out), np.asarray(ref), rtol=2e-3, atol=2e-3)

    print("KERNEL_OK")
</pallas_src>

<mosaic_0001>
module attributes {stable_mosaic.version = 11 : i64} {
  func.func @_mobblock_kernel(%arg0: i32, %arg1: memref<1x64x27xf32, #tpu.memory_space<vmem>>, %arg2: memref<27x32xf32, #tpu.memory_space<vmem>>, %arg3: memref<1x32xf32, #tpu.memory_space<vmem>>, %arg4: memref<9x32xf32, #tpu.memory_space<vmem>>, %arg5: memref<1x32xf32, #tpu.memory_space<vmem>>, %arg6: memref<32x64xf32, #tpu.memory_space<vmem>>, %arg7: memref<1x64xf32, #tpu.memory_space<vmem>>, %arg8: memref<9x64xf32, #tpu.memory_space<vmem>>, %arg9: memref<1x64xf32, #tpu.memory_space<vmem>>, %arg10: memref<64x128xf32, #tpu.memory_space<vmem>>, %arg11: memref<1x128xf32, #tpu.memory_space<vmem>>, %arg12: memref<9x128xf32, #tpu.memory_space<vmem>>, %arg13: memref<1x128xf32, #tpu.memory_space<vmem>>, %arg14: memref<128x128xf32, #tpu.memory_space<vmem>>, %arg15: memref<1x128xf32, #tpu.memory_space<vmem>>, %arg16: memref<1x8x8x128xf32, #tpu.memory_space<vmem>>, %arg17: memref<1x10x8x32xf32, #tpu.memory_space<vmem>>, %arg18: memref<1x10x8x64xf32, #tpu.memory_space<vmem>>, %arg19: memref<1x10x8x128xf32, #tpu.memory_space<vmem>>) attributes {dimension_semantics = [#tpu.dimension_semantics<parallel>], iteration_bounds = array<i64: 2>, scalar_prefetch = 0 : i64, scratch_operands = 3 : i64, tpu.core_type = #tpu.core_type<tc>, window_params = [{transform_indices = @transform_0, window_bounds = array<i64: 1, 64, 27>}, {pipeline_mode = #tpu.pipeline_mode<synchronous>, transform_indices = @transform_1, window_bounds = array<i64: 27, 32>}, {pipeline_mode = #tpu.pipeline_mode<synchronous>, transform_indices = @transform_2, window_bounds = array<i64: 1, 32>}, {pipeline_mode = #tpu.pipeline_mode<synchronous>, transform_indices = @transform_3, window_bounds = array<i64: 9, 32>}, {pipeline_mode = #tpu.pipeline_mode<synchronous>, transform_indices = @transform_4, window_bounds = array<i64: 1, 32>}, {pipeline_mode = #tpu.pipeline_mode<synchronous>, transform_indices = @transform_5, window_bounds = array<i64: 32, 64>}, {pipeline_mode = #tpu.pipeline_mode<synchronous>, transform_indices = @transform_6, window_bounds = array<i64: 1, 64>}, {pipeline_mode = #tpu.pipeline_mode<synchronous>, transform_indices = @transform_7, window_bounds = array<i64: 9, 64>}, {pipeline_mode = #tpu.pipeline_mode<synchronous>, transform_indices = @transform_8, window_bounds = array<i64: 1, 64>}, {pipeline_mode = #tpu.pipeline_mode<synchronous>, transform_indices = @transform_9, window_bounds = array<i64: 64, 128>}, {pipeline_mode = #tpu.pipeline_mode<synchronous>, transform_indices = @transform_10, window_bounds = array<i64: 1, 128>}, {pipeline_mode = #tpu.pipeline_mode<synchronous>, transform_indices = @transform_11, window_bounds = array<i64: 9, 128>}, {pipeline_mode = #tpu.pipeline_mode<synchronous>, transform_indices = @transform_12, window_bounds = array<i64: 1, 128>}, {pipeline_mode = #tpu.pipeline_mode<synchronous>, transform_indices = @transform_13, window_bounds = array<i64: 128, 128>}, {pipeline_mode = #tpu.pipeline_mode<synchronous>, transform_indices = @transform_14, window_bounds = array<i64: 1, 128>}, {transform_indices = @transform_15, window_bounds = array<i64: 1, 8, 8, 128>}]} {
    %c0 = arith.constant 0 : index
    %c0_0 = arith.constant 0 : index
    %c0_1 = arith.constant 0 : index
    %0 = vector.load %arg1[%c0, %c0_0, %c0_1] : memref<1x64x27xf32, #tpu.memory_space<vmem>>, vector<1x64x27xf32>
    %1 = vector.shape_cast %0 : vector<1x64x27xf32> to vector<64x27xf32>
    %c0_2 = arith.constant 0 : index
    %c0_3 = arith.constant 0 : index
    %2 = vector.load %arg2[%c0_2, %c0_3] : memref<27x32xf32, #tpu.memory_space<vmem>>, vector<27x32xf32>
    %cst = arith.constant dense<0.000000e+00> : vector<64x32xf32>
    %3 = tpu.matmul %1, %2, %cst {dimension_numbers = #tpu.dot_dimension_numbers<[1], [0], [0], [1], [0, 0, 1, 1], [], []>} : vector<64x27xf32>, vector<27x32xf32>, vector<64x32xf32> -> vector<64x32xf32>
    %c0_4 = arith.constant 0 : index
    %c0_5 = arith.constant 0 : index
    %4 = vector.load %arg3[%c0_4, %c0_5] : memref<1x32xf32, #tpu.memory_space<vmem>>, vector<1x32xf32>
    %5 = vector.broadcast %4 : vector<1x32xf32> to vector<64x32xf32>
    %6 = arith.addf %3, %5 : vector<64x32xf32>
    %cst_6 = arith.constant 0.000000e+00 : f32
    %7 = vector.broadcast %cst_6 : f32 to vector<64x32xf32>
    %8 = arith.maximumf %6, %7 : vector<64x32xf32>
    %9 = vector.shape_cast %8 : vector<64x32xf32> to vector<1x8x8x32xf32>
    %cst_7 = arith.constant 0.000000e+00 : f32
    %10 = vector.broadcast %cst_7 : f32 to vector<1x1x8x32xf32>
    %c0_8 = arith.constant 0 : index
    %c0_9 = arith.constant 0 : index
    %c0_10 = arith.constant 0 : index
    %c0_11 = arith.constant 0 : index
    %11 = vector.load %arg17[%c0_8, %c0_9, %c0_10, %c0_11] : memref<1x10x8x32xf32, #tpu.memory_space<vmem>>, vector<1x1x8x32xf32>
    tpu.vector_store %arg17[%c0_8, %c0_9, %c0_10, %c0_11], %10 {strides = array<i32>} : memref<1x10x8x32xf32, #tpu.memory_space<vmem>>, vector<1x1x8x32xf32>,
    %c0_12 = arith.constant 0 : index
    %c9 = arith.constant 9 : index
    %c0_13 = arith.constant 0 : index
    %c0_14 = arith.constant 0 : index
    %12 = vector.load %arg17[%c0_12, %c9, %c0_13, %c0_14] : memref<1x10x8x32xf32, #tpu.memory_space<vmem>>, vector<1x1x8x32xf32>
    tpu.vector_store %arg17[%c0_12, %c9, %c0_13, %c0_14], %10 {strides = array<i32>} : memref<1x10x8x32xf32, #tpu.memory_space<vmem>>, vector<1x1x8x32xf32>,
    %c0_15 = arith.constant 0 : index
    %c1 = arith.constant 1 : index
    %c0_16 = arith.constant 0 : index
    %c0_17 = arith.constant 0 : index
    %13 = vector.load %arg17[%c0_15, %c1, %c0_16, %c0_17] : memref<1x10x8x32xf32, #tpu.memory_space<vmem>>, vector<1x8x8x32xf32>
    tpu.vector_store %arg17[%c0_15, %c1, %c0_16, %c0_17], %9 {strides = array<i32>} : memref<1x10x8x32xf32, #tpu.memory_space<vmem>>, vector<1x8x8x32xf32>,
    %c0_18 = arith.constant 0 : index
    %c0_19 = arith.constant 0 : index
    %c0_20 = arith.constant 0 : index
    %c0_21 = arith.constant 0 : index
    %14 = vector.load %arg17[%c0_18, %c0_19, %c0_20, %c0_21] : memref<1x10x8x32xf32, #tpu.memory_space<vmem>>, vector<1x10x8x32xf32>
    %15 = tpu.iota {dimensions = array<i32: 1>} : vector<1x8x1xi32>
    %c0_i32 = arith.constant 0 : i32
    %16 = vector.broadcast %c0_i32 : i32 to vector<1x8x1xi32>
    %17 = arith.cmpi sgt, %15, %16 : vector<1x8x1xi32>
    %18 = arith.extui %17 : vector<1x8x1xi1> to vector<1x8x1xi32>
    %19 = arith.sitofp %18 : vector<1x8x1xi32> to vector<1x8x1xf32>
    %c7_i32 = arith.constant 7 : i32
    %20 = vector.broadcast %c7_i32 : i32 to vector<1x8x1xi32>
    %21 = arith.cmpi slt, %15, %20 : vector<1x8x1xi32>
    %22 = arith.extui %21 : vector<1x8x1xi1> to vector<1x8x1xi32>
    %23 = arith.sitofp %22 : vector<1x8x1xi32> to vector<1x8x1xf32>
    %24 = vector.shape_cast %14 : vector<1x10x8x32xf32> to vector<10x8x32xf32>
    %c1_i32 = arith.constant 1 : i32
    %25 = tpu.dynamic_rotate %24 by %c1_i32 dim 1 : vector<10x8x32xf32>, i32 -> vector<10x8x32xf32>
    %26 = vector.broadcast %19 : vector<1x8x1xf32> to vector<10x8x32xf32>
    %27 = arith.mulf %25, %26 : vector<10x8x32xf32>
    %28 = vector.shape_cast %27 : vector<10x8x32xf32> to vector<1x10x8x32xf32>
    %c7_i32_22 = arith.constant 7 : i32
    %29 = tpu.dynamic_rotate %24 by %c7_i32_22 dim 1 : vector<10x8x32xf32>, i32 -> vector<10x8x32xf32>
    %30 = vector.broadcast %23 : vector<1x8x1xf32> to vector<10x8x32xf32>
    %31 = arith.mulf %29, %30 : vector<10x8x32xf32>
    %32 = vector.shape_cast %31 : vector<10x8x32xf32> to vector<1x10x8x32xf32>
    %c0_23 = arith.constant 0 : index
    %c0_24 = arith.constant 0 : index
    %33 = vector.load %arg4[%c0_23, %c0_24] : memref<9x32xf32, #tpu.memory_space<vmem>>, vector<9x32xf32>
    %cst_25 = arith.constant 0.000000e+00 : f32
    %34 = vector.broadcast %cst_25 : f32 to vector<1x8x8x32xf32>
    %35 = vector.extract_strided_slice %28 {offsets = [0, 0, 0, 0], sizes = [1, 8, 8, 32], strides = [1, 1, 1, 1]} : vector<1x10x8x32xf32> to vector<1x8x8x32xf32>
    %36 = vector.extract_strided_slice %33 {offsets = [0, 0], sizes = [1, 32], strides = [1, 1]} : vector<9x32xf32> to vector<1x32xf32>
    %37 = vector.shape_cast %36 : vector<1x32xf32> to vector<1x1x1x32xf32>
    %38 = vector.broadcast %37 : vector<1x1x1x32xf32> to vector<1x8x8x32xf32>
    %39 = arith.mulf %35, %38 : vector<1x8x8x32xf32>
    %40 = arith.addf %34, %39 : vector<1x8x8x32xf32>
    %41 = vector.extract_strided_slice %14 {offsets = [0, 0, 0, 0], sizes = [1, 8, 8, 32], strides = [1, 1, 1, 1]} : vector<1x10x8x32xf32> to vector<1x8x8x32xf32>
    %42 = vector.extract_strided_slice %33 {offsets = [1, 0], sizes = [1, 32], strides = [1, 1]} : vector<9x32xf32> to vector<1x32xf32>
    %43 = vector.shape_cast %42 : vector<1x32xf32> to vector<1x1x1x32xf32>
    %44 = vector.broadcast %43 : vector<1x1x1x32xf32> to vector<1x8x8x32xf32>
    %45 = arith.mulf %41, %44 : vector<1x8x8x32xf32>
    %46 = arith.addf %40, %45 : vector<1x8x8x32xf32>
    %47 = vector.extract_strided_slice %32 {offsets = [0, 0, 0, 0], sizes = [1, 8, 8, 32], strides = [1, 1, 1, 1]} : vector<1x10x8x32xf32> to vector<1x8x8x32xf32>
    %48 = vector.extract_strided_slice %33 {offsets = [2, 0], sizes = [1, 32], strides = [1, 1]} : vector<9x32xf32> to vector<1x32xf32>
    %49 = vector.shape_cast %48 : vector<1x32xf32> to vector<1x1x1x32xf32>
    %50 = vector.broadcast %49 : vector<1x1x1x32xf32> to vector<1x8x8x32xf32>
    %51 = arith.mulf %47, %50 : vector<1x8x8x32xf32>
    %52 = arith.addf %46, %51 : vector<1x8x8x32xf32>
    %53 = vector.extract_strided_slice %28 {offsets = [0, 1, 0, 0], sizes = [1, 8, 8, 32], strides = [1, 1, 1, 1]} : vector<1x10x8x32xf32> to vector<1x8x8x32xf32>
    %54 = vector.extract_strided_slice %33 {offsets = [3, 0], sizes = [1, 32], strides = [1, 1]} : vector<9x32xf32> to vector<1x32xf32>
    %55 = vector.shape_cast %54 : vector<1x32xf32> to vector<1x1x1x32xf32>
    %56 = vector.broadcast %55 : vector<1x1x1x32xf32> to vector<1x8x8x32xf32>
    %57 = arith.mulf %53, %56 : vector<1x8x8x32xf32>
    %58 = arith.addf %52, %57 : vector<1x8x8x32xf32>
    %59 = vector.extract_strided_slice %14 {offsets = [0, 1, 0, 0], sizes = [1, 8, 8, 32], strides = [1, 1, 1, 1]} : vector<1x10x8x32xf32> to vector<1x8x8x32xf32>
    %60 = vector.extract_strided_slice %33 {offsets = [4, 0], sizes = [1, 32], strides = [1, 1]} : vector<9x32xf32> to vector<1x32xf32>
    %61 = vector.shape_cast %60 : vector<1x32xf32> to vector<1x1x1x32xf32>
    %62 = vector.broadcast %61 : vector<1x1x1x32xf32> to vector<1x8x8x32xf32>
    %63 = arith.mulf %59, %62 : vector<1x8x8x32xf32>
    %64 = arith.addf %58, %63 : vector<1x8x8x32xf32>
    %65 = vector.extract_strided_slice %32 {offsets = [0, 1, 0, 0], sizes = [1, 8, 8, 32], strides = [1, 1, 1, 1]} : vector<1x10x8x32xf32> to vector<1x8x8x32xf32>
    %66 = vector.extract_strided_slice %33 {offsets = [5, 0], sizes = [1, 32], strides = [1, 1]} : vector<9x32xf32> to vector<1x32xf32>
    %67 = vector.shape_cast %66 : vector<1x32xf32> to vector<1x1x1x32xf32>
    %68 = vector.broadcast %67 : vector<1x1x1x32xf32> to vector<1x8x8x32xf32>
    %69 = arith.mulf %65, %68 : vector<1x8x8x32xf32>
    %70 = arith.addf %64, %69 : vector<1x8x8x32xf32>
    %71 = vector.extract_strided_slice %28 {offsets = [0, 2, 0, 0], sizes = [1, 8, 8, 32], strides = [1, 1, 1, 1]} : vector<1x10x8x32xf32> to vector<1x8x8x32xf32>
    %72 = vector.extract_strided_slice %33 {offsets = [6, 0], sizes = [1, 32], strides = [1, 1]} : vector<9x32xf32> to vector<1x32xf32>
    %73 = vector.shape_cast %72 : vector<1x32xf32> to vector<1x1x1x32xf32>
    %74 = vector.broadcast %73 : vector<1x1x1x32xf32> to vector<1x8x8x32xf32>
    %75 = arith.mulf %71, %74 : vector<1x8x8x32xf32>
    %76 = arith.addf %70, %75 : vector<1x8x8x32xf32>
    %77 = vector.extract_strided_slice %14 {offsets = [0, 2, 0, 0], sizes = [1, 8, 8, 32], strides = [1, 1, 1, 1]} : vector<1x10x8x32xf32> to vector<1x8x8x32xf32>
    %78 = vector.extract_strided_slice %33 {offsets = [7, 0], sizes = [1, 32], strides = [1, 1]} : vector<9x32xf32> to vector<1x32xf32>
    %79 = vector.shape_cast %78 : vector<1x32xf32> to vector<1x1x1x32xf32>
    %80 = vector.broadcast %79 : vector<1x1x1x32xf32> to vector<1x8x8x32xf32>
    %81 = arith.mulf %77, %80 : vector<1x8x8x32xf32>
    %82 = arith.addf %76, %81 : vector<1x8x8x32xf32>
    %83 = vector.extract_strided_slice %32 {offsets = [0, 2, 0, 0], sizes = [1, 8, 8, 32], strides = [1, 1, 1, 1]} : vector<1x10x8x32xf32> to vector<1x8x8x32xf32>
    %84 = vector.extract_strided_slice %33 {offsets = [8, 0], sizes = [1, 32], strides = [1, 1]} : vector<9x32xf32> to vector<1x32xf32>
    %85 = vector.shape_cast %84 : vector<1x32xf32> to vector<1x1x1x32xf32>
    %86 = vector.broadcast %85 : vector<1x1x1x32xf32> to vector<1x8x8x32xf32>
    %87 = arith.mulf %83, %86 : vector<1x8x8x32xf32>
    %88 = arith.addf %82, %87 : vector<1x8x8x32xf32>
    %c0_26 = arith.constant 0 : index
    %c0_27 = arith.constant 0 : index
    %89 = vector.load %arg5[%c0_26, %c0_27] : memref<1x32xf32, #tpu.memory_space<vmem>>, vector<1x32xf32>
    %90 = vector.shape_cast %89 : vector<1x32xf32> to vector<1x1x1x32xf32>
    %91 = vector.broadcast %90 : vector<1x1x1x32xf32> to vector<1x8x8x32xf32>
    %92 = arith.addf %88, %91 : vector<1x8x8x32xf32>
    %cst_28 = arith.constant 0.000000e+00 : f32
    %93 = vector.broadcast %cst_28 : f32 to vector<1x8x8x32xf32>
    %94 = arith.maximumf %92, %93 : vector<1x8x8x32xf32>
    %95 = vector.shape_cast %94 : vector<1x8x8x32xf32> to vector<64x32xf32>
    %c0_29 = arith.constant 0 : index
    %c0_30 = arith.constant 0 : index
    %96 = vector.load %arg6[%c0_29, %c0_30] : memref<32x64xf32, #tpu.memory_space<vmem>>, vector<32x64xf32>
    %cst_31 = arith.constant dense<0.000000e+00> : vector<64x64xf32>
    %97 = tpu.matmul %95, %96, %cst_31 {dimension_numbers = #tpu.dot_dimension_numbers<[1], [0], [0], [1], [0, 0, 1, 1], [], []>} : vector<64x32xf32>, vector<32x64xf32>, vector<64x64xf32> -> vector<64x64xf32>
    %c0_32 = arith.constant 0 : index
    %c0_33 = arith.constant 0 : index
    %98 = vector.load %arg7[%c0_32, %c0_33] : memref<1x64xf32, #tpu.memory_space<vmem>>, vector<1x64xf32>
    %99 = vector.broadcast %98 : vector<1x64xf32> to vector<64x64xf32>
    %100 = arith.addf %97, %99 : vector<64x64xf32>
    %cst_34 = arith.constant 0.000000e+00 : f32
    %101 = vector.broadcast %cst_34 : f32 to vector<64x64xf32>
    %102 = arith.maximumf %100, %101 : vector<64x64xf32>
    %103 = vector.shape_cast %102 : vector<64x64xf32> to vector<1x8x8x64xf32>
    %cst_35 = arith.constant 0.000000e+00 : f32
    %104 = vector.broadcast %cst_35 : f32 to vector<1x1x8x64xf32>
    %c0_36 = arith.constant 0 : index
    %c0_37 = arith.constant 0 : index
    %c0_38 = arith.constant 0 : index
    %c0_39 = arith.constant 0 : index
    %105 = vector.load %arg18[%c0_36, %c0_37, %c0_38, %c0_39] : memref<1x10x8x64xf32, #tpu.memory_space<vmem>>, vector<1x1x8x64xf32>
    tpu.vector_store %arg18[%c0_36, %c0_37, %c0_38, %c0_39], %104 {strides = array<i32>} : memref<1x10x8x64xf32, #tpu.memory_space<vmem>>, vector<1x1x8x64xf32>,
    %c0_40 = arith.constant 0 : index
    %c9_41 = arith.constant 9 : index
    %c0_42 = arith.constant 0 : index
    %c0_43 = arith.constant 0 : index
    %106 = vector.load %arg18[%c0_40, %c9_41, %c0_42, %c0_43] : memref<1x10x8x64xf32, #tpu.memory_space<vmem>>, vector<1x1x8x64xf32>
    tpu.vector_store %arg18[%c0_40, %c9_41, %c0_42, %c0_43], %104 {strides = array<i32>} : memref<1x10x8x64xf32, #tpu.memory_space<vmem>>, vector<1x1x8x64xf32>,
    %c0_44 = arith.constant 0 : index
    %c1_45 = arith.constant 1 : index
    %c0_46 = arith.constant 0 : index
    %c0_47 = arith.constant 0 : index
    %107 = vector.load %arg18[%c0_44, %c1_45, %c0_46, %c0_47] : memref<1x10x8x64xf32, #tpu.memory_space<vmem>>, vector<1x8x8x64xf32>
    tpu.vector_store %arg18[%c0_44, %c1_45, %c0_46, %c0_47], %103 {strides = array<i32>} : memref<1x10x8x64xf32, #tpu.memory_space<vmem>>, vector<1x8x8x64xf32>,
    %c0_48 = arith.constant 0 : index
    %c0_49 = arith.constant 0 : index
    %c0_50 = arith.constant 0 : index
    %c0_51 = arith.constant 0 : index
    %108 = vector.load %arg18[%c0_48, %c0_49, %c0_50, %c0_51] : memref<1x10x8x64xf32, #tpu.memory_space<vmem>>, vector<1x10x8x64xf32>
    %109 = tpu.iota {dimensions = array<i32: 1>} : vector<1x8x1xi32>
    %c0_i32_52 = arith.constant 0 : i32
    %110 = vector.broadcast %c0_i32_52 : i32 to vector<1x8x1xi32>
    %111 = arith.cmpi sgt, %109, %110 : vector<1x8x1xi32>
    %112 = arith.extui %111 : vector<1x8x1xi1> to vector<1x8x1xi32>
    %113 = arith.sitofp %112 : vector<1x8x1xi32> to vector<1x8x1xf32>
    %c7_i32_53 = arith.constant 7 : i32
    %114 = vector.broadcast %c7_i32_53 : i32 to vector<1x8x1xi32>
    %115 = arith.cmpi slt, %109, %114 : vector<1x8x1xi32>
    %116 = arith.extui %115 : vector<1x8x1xi1> to vector<1x8x1xi32>
    %117 = arith.sitofp %116 : vector<1x8x1xi32> to vector<1x8x1xf32>
    %118 = vector.shape_cast %108 : vector<1x10x8x64xf32> to vector<10x8x64xf32>
    %c1_i32_54 = arith.constant 1 : i32
    %119 = tpu.dynamic_rotate %118 by %c1_i32_54 dim 1 : vector<10x8x64xf32>, i32 -> vector<10x8x64xf32>
    %120 = vector.broadcast %113 : vector<1x8x1xf32> to vector<10x8x64xf32>
    %121 = arith.mulf %119, %120 : vector<10x8x64xf32>
    %122 = vector.shape_cast %121 : vector<10x8x64xf32> to vector<1x10x8x64xf32>
    %c7_i32_55 = arith.constant 7 : i32
    %123 = tpu.dynamic_rotate %118 by %c7_i32_55 dim 1 : vector<10x8x64xf32>, i32 -> vector<10x8x64xf32>
    %124 = vector.broadcast %117 : vector<1x8x1xf32> to vector<10x8x64xf32>
    %125 = arith.mulf %123, %124 : vector<10x8x64xf32>
    %126 = vector.shape_cast %125 : vector<10x8x64xf32> to vector<1x10x8x64xf32>
    %c0_56 = arith.constant 0 : index
    %c0_57 = arith.constant 0 : index
    %127 = vector.load %arg8[%c0_56, %c0_57] : memref<9x64xf32, #tpu.memory_space<vmem>>, vector<9x64xf32>
    %cst_58 = arith.constant 0.000000e+00 : f32
    %128 = vector.broadcast %cst_58 : f32 to vector<1x8x8x64xf32>
    %129 = vector.extract_strided_slice %122 {offsets = [0, 0, 0, 0], sizes = [1, 8, 8, 64], strides = [1, 1, 1, 1]} : vector<1x10x8x64xf32> to vector<1x8x8x64xf32>
    %130 = vector.extract_strided_slice %127 {offsets = [0, 0], sizes = [1, 64], strides = [1, 1]} : vector<9x64xf32> to vector<1x64xf32>
    %131 = vector.shape_cast %130 : vector<1x64xf32> to vector<1x1x1x64xf32>
    %132 = vector.broadcast %131 : vector<1x1x1x64xf32> to vector<1x8x8x64xf32>
    %133 = arith.mulf %129, %132 : vector<1x8x8x64xf32>
    %134 = arith.addf %128, %133 : vector<1x8x8x64xf32>
    %135 = vector.extract_strided_slice %108 {offsets = [0, 0, 0, 0], sizes = [1, 8, 8, 64], strides = [1, 1, 1, 1]} : vector<1x10x8x64xf32> to vector<1x8x8x64xf32>
    %136 = vector.extract_strided_slice %127 {offsets = [1, 0], sizes = [1, 64], strides = [1, 1]} : vector<9x64xf32> to vector<1x64xf32>
    %137 = vector.shape_cast %136 : vector<1x64xf32> to vector<1x1x1x64xf32>
    %138 = vector.broadcast %137 : vector<1x1x1x64xf32> to vector<1x8x8x64xf32>
    %139 = arith.mulf %135, %138 : vector<1x8x8x64xf32>
    %140 = arith.addf %134, %139 : vector<1x8x8x64xf32>
    %141 = vector.extract_strided_slice %126 {offsets = [0, 0, 0, 0], sizes = [1, 8, 8, 64], strides = [1, 1, 1, 1]} : vector<1x10x8x64xf32> to vector<1x8x8x64xf32>
    %142 = vector.extract_strided_slice %127 {offsets = [2, 0], sizes = [1, 64], strides = [1, 1]} : vector<9x64xf32> to vector<1x64xf32>
    %143 = vector.shape_cast %142 : vector<1x64xf32> to vector<1x1x1x64xf32>
    %144 = vector.broadcast %143 : vector<1x1x1x64xf32> to vector<1x8x8x64xf32>
    %145 = arith.mulf %141, %144 : vector<1x8x8x64xf32>
    %146 = arith.addf %140, %145 : vector<1x8x8x64xf32>
    %147 = vector.extract_strided_slice %122 {offsets = [0, 1, 0, 0], sizes = [1, 8, 8, 64], strides = [1, 1, 1, 1]} : vector<1x10x8x64xf32> to vector<1x8x8x64xf32>
    %148 = vector.extract_strided_slice %127 {offsets = [3, 0], sizes = [1, 64], strides = [1, 1]} : vector<9x64xf32> to vector<1x64xf32>
    %149 = vector.shape_cast %148 : vector<1x64xf32> to vector<1x1x1x64xf32>
    %150 = vector.broadcast %149 : vector<1x1x1x64xf32> to vector<1x8x8x64xf32>
    %151 = arith.mulf %147, %150 : vector<1x8x8x64xf32>
    %152 = arith.addf %146, %151 : vector<1x8x8x64xf32>
    %153 = vector.extract_strided_slice %108 {offsets = [0, 1, 0, 0], sizes = [1, 8, 8, 64], strides = [1, 1, 1, 1]} : vector<1x10x8x64xf32> to vector<1x8x8x64xf32>
    %154 = vector.extract_strided_slice %127 {offsets = [4, 0], sizes = [1, 64], strides = [1, 1]} : vector<9x64xf32> to vector<1x64xf32>
    %155 = vector.shape_cast %154 : vector<1x64xf32> to vector<1x1x1x64xf32>
    %156 = vector.broadcast %155 : vector<1x1x1x64xf32> to vector<1x8x8x64xf32>
    %157 = arith.mulf %153, %156 : vector<1x8x8x64xf32>
    %158 = arith.addf %152, %157 : vector<1x8x8x64xf32>
    %159 = vector.extract_strided_slice %126 {offsets = [0, 1, 0, 0], sizes = [1, 8, 8, 64], strides = [1, 1, 1, 1]} : vector<1x10x8x64xf32> to vector<1x8x8x64xf32>
    %160 = vector.extract_strided_slice %127 {offsets = [5, 0], sizes = [1, 64], strides = [1, 1]} : vector<9x64xf32> to vector<1x64xf32>
    %161 = vector.shape_cast %160 : vector<1x64xf32> to vector<1x1x1x64xf32>
    %162 = vector.broadcast %161 : vector<1x1x1x64xf32> to vector<1x8x8x64xf32>
    %163 = arith.mulf %159, %162 : vector<1x8x8x64xf32>
    %164 = arith.addf %158, %163 : vector<1x8x8x64xf32>
    %165 = vector.extract_strided_slice %122 {offsets = [0, 2, 0, 0], sizes = [1, 8, 8, 64], strides = [1, 1, 1, 1]} : vector<1x10x8x64xf32> to vector<1x8x8x64xf32>
    %166 = vector.extract_strided_slice %127 {offsets = [6, 0], sizes = [1, 64], strides = [1, 1]} : vector<9x64xf32> to vector<1x64xf32>
    %167 = vector.shape_cast %166 : vector<1x64xf32> to vector<1x1x1x64xf32>
    %168 = vector.broadcast %167 : vector<1x1x1x64xf32> to vector<1x8x8x64xf32>
    %169 = arith.mulf %165, %168 : vector<1x8x8x64xf32>
    %170 = arith.addf %164, %169 : vector<1x8x8x64xf32>
    %171 = vector.extract_strided_slice %108 {offsets = [0, 2, 0, 0], sizes = [1, 8, 8, 64], strides = [1, 1, 1, 1]} : vector<1x10x8x64xf32> to vector<1x8x8x64xf32>
    %172 = vector.extract_strided_slice %127 {offsets = [7, 0], sizes = [1, 64], strides = [1, 1]} : vector<9x64xf32> to vector<1x64xf32>
    %173 = vector.shape_cast %172 : vector<1x64xf32> to vector<1x1x1x64xf32>
    %174 = vector.broadcast %173 : vector<1x1x1x64xf32> to vector<1x8x8x64xf32>
    %175 = arith.mulf %171, %174 : vector<1x8x8x64xf32>
    %176 = arith.addf %170, %175 : vector<1x8x8x64xf32>
    %177 = vector.extract_strided_slice %126 {offsets = [0, 2, 0, 0], sizes = [1, 8, 8, 64], strides = [1, 1, 1, 1]} : vector<1x10x8x64xf32> to vector<1x8x8x64xf32>
    %178 = vector.extract_strided_slice %127 {offsets = [8, 0], sizes = [1, 64], strides = [1, 1]} : vector<9x64xf32> to vector<1x64xf32>
    %179 = vector.shape_cast %178 : vector<1x64xf32> to vector<1x1x1x64xf32>
    %180 = vector.broadcast %179 : vector<1x1x1x64xf32> to vector<1x8x8x64xf32>
    %181 = arith.mulf %177, %180 : vector<1x8x8x64xf32>
    %182 = arith.addf %176, %181 : vector<1x8x8x64xf32>
    %c0_59 = arith.constant 0 : index
    %c0_60 = arith.constant 0 : index
    %183 = vector.load %arg9[%c0_59, %c0_60] : memref<1x64xf32, #tpu.memory_space<vmem>>, vector<1x64xf32>
    %184 = vector.shape_cast %183 : vector<1x64xf32> to vector<1x1x1x64xf32>
    %185 = vector.broadcast %184 : vector<1x1x1x64xf32> to vector<1x8x8x64xf32>
    %186 = arith.addf %182, %185 : vector<1x8x8x64xf32>
    %cst_61 = arith.constant 0.000000e+00 : f32
    %187 = vector.broadcast %cst_61 : f32 to vector<1x8x8x64xf32>
    %188 = arith.maximumf %186, %187 : vector<1x8x8x64xf32>
    %189 = vector.shape_cast %188 : vector<1x8x8x64xf32> to vector<64x64xf32>
    %c0_62 = arith.constant 0 : index
    %c0_63 = arith.constant 0 : index
    %190 = vector.load %arg10[%c0_62, %c0_63] : memref<64x128xf32, #tpu.memory_space<vmem>>, vector<64x128xf32>
    %cst_64 = arith.constant dense<0.000000e+00> : vector<64x128xf32>
    %191 = tpu.matmul %189, %190, %cst_64 {dimension_numbers = #tpu.dot_dimension_numbers<[1], [0], [0], [1], [0, 0, 1, 1], [], []>} : vector<64x64xf32>, vector<64x128xf32>, vector<64x128xf32> -> vector<64x128xf32>
    %c0_65 = arith.constant 0 : index
    %c0_66 = arith.constant 0 : index
    %192 = vector.load %arg11[%c0_65, %c0_66] : memref<1x128xf32, #tpu.memory_space<vmem>>, vector<1x128xf32>
    %193 = vector.broadcast %192 : vector<1x128xf32> to vector<64x128xf32>
    %194 = arith.addf %191, %193 : vector<64x128xf32>
    %cst_67 = arith.constant 0.000000e+00 : f32
    %195 = vector.broadcast %cst_67 : f32 to vector<64x128xf32>
    %196 = arith.maximumf %194, %195 : vector<64x128xf32>
    %197 = vector.shape_cast %196 : vector<64x128xf32> to vector<1x8x8x128xf32>
    %cst_68 = arith.constant 0.000000e+00 : f32
    %198 = vector.broadcast %cst_68 : f32 to vector<1x1x8x128xf32>
    %c0_69 = arith.constant 0 : index
    %c0_70 = arith.constant 0 : index
    %c0_71 = arith.constant 0 : index
    %c0_72 = arith.constant 0 : index
    %199 = vector.load %arg19[%c0_69, %c0_70, %c0_71, %c0_72] : memref<1x10x8x128xf32, #tpu.memory_space<vmem>>, vector<1x1x8x128xf32>
    tpu.vector_store %arg19[%c0_69, %c0_70, %c0_71, %c0_72], %198 {strides = array<i32>} : memref<1x10x8x128xf32, #tpu.memory_space<vmem>>, vector<1x1x8x128xf32>,
    %c0_73 = arith.constant 0 : index
    %c9_74 = arith.constant 9 : index
    %c0_75 = arith.constant 0 : index
    %c0_76 = arith.constant 0 : index
    %200 = vector.load %arg19[%c0_73, %c9_74, %c0_75, %c0_76] : memref<1x10x8x128xf32, #tpu.memory_space<vmem>>, vector<1x1x8x128xf32>
    tpu.vector_store %arg19[%c0_73, %c9_74, %c0_75, %c0_76], %198 {strides = array<i32>} : memref<1x10x8x128xf32, #tpu.memory_space<vmem>>, vector<1x1x8x128xf32>,
    %c0_77 = arith.constant 0 : index
    %c1_78 = arith.constant 1 : index
    %c0_79 = arith.constant 0 : index
    %c0_80 = arith.constant 0 : index
    %201 = vector.load %arg19[%c0_77, %c1_78, %c0_79, %c0_80] : memref<1x10x8x128xf32, #tpu.memory_space<vmem>>, vector<1x8x8x128xf32>
    tpu.vector_store %arg19[%c0_77, %c1_78, %c0_79, %c0_80], %197 {strides = array<i32>} : memref<1x10x8x128xf32, #tpu.memory_space<vmem>>, vector<1x8x8x128xf32>,
    %c0_81 = arith.constant 0 : index
    %c0_82 = arith.constant 0 : index
    %c0_83 = arith.constant 0 : index
    %c0_84 = arith.constant 0 : index
    %202 = vector.load %arg19[%c0_81, %c0_82, %c0_83, %c0_84] : memref<1x10x8x128xf32, #tpu.memory_space<vmem>>, vector<1x10x8x128xf32>
    %203 = tpu.iota {dimensions = array<i32: 1>} : vector<1x8x1xi32>
    %c0_i32_85 = arith.constant 0 : i32
    %204 = vector.broadcast %c0_i32_85 : i32 to vector<1x8x1xi32>
    %205 = arith.cmpi sgt, %203, %204 : vector<1x8x1xi32>
    %206 = arith.extui %205 : vector<1x8x1xi1> to vector<1x8x1xi32>
    %207 = arith.sitofp %206 : vector<1x8x1xi32> to vector<1x8x1xf32>
    %c7_i32_86 = arith.constant 7 : i32
    %208 = vector.broadcast %c7_i32_86 : i32 to vector<1x8x1xi32>
    %209 = arith.cmpi slt, %203, %208 : vector<1x8x1xi32>
    %210 = arith.extui %209 : vector<1x8x1xi1> to vector<1x8x1xi32>
    %211 = arith.sitofp %210 : vector<1x8x1xi32> to vector<1x8x1xf32>
    %212 = vector.shape_cast %202 : vector<1x10x8x128xf32> to vector<10x8x128xf32>
    %c1_i32_87 = arith.constant 1 : i32
    %213 = tpu.dynamic_rotate %212 by %c1_i32_87 dim 1 : vector<10x8x128xf32>, i32 -> vector<10x8x128xf32>
    %214 = vector.broadcast %207 : vector<1x8x1xf32> to vector<10x8x128xf32>
    %215 = arith.mulf %213, %214 : vector<10x8x128xf32>
    %216 = vector.shape_cast %215 : vector<10x8x128xf32> to vector<1x10x8x128xf32>
    %c7_i32_88 = arith.constant 7 : i32
    %217 = tpu.dynamic_rotate %212 by %c7_i32_88 dim 1 : vector<10x8x128xf32>, i32 -> vector<10x8x128xf32>
    %218 = vector.broadcast %211 : vector<1x8x1xf32> to vector<10x8x128xf32>
    %219 = arith.mulf %217, %218 : vector<10x8x128xf32>
    %220 = vector.shape_cast %219 : vector<10x8x128xf32> to vector<1x10x8x128xf32>
    %c0_89 = arith.constant 0 : index
    %c0_90 = arith.constant 0 : index
    %221 = vector.load %arg12[%c0_89, %c0_90] : memref<9x128xf32, #tpu.memory_space<vmem>>, vector<9x128xf32>
    %cst_91 = arith.constant 0.000000e+00 : f32
    %222 = vector.broadcast %cst_91 : f32 to vector<1x8x8x128xf32>
    %223 = vector.extract_strided_slice %216 {offsets = [0, 0, 0, 0], sizes = [1, 8, 8, 128], strides = [1, 1, 1, 1]} : vector<1x10x8x128xf32> to vector<1x8x8x128xf32>
    %224 = vector.extract_strided_slice %221 {offsets = [0, 0], sizes = [1, 128], strides = [1, 1]} : vector<9x128xf32> to vector<1x128xf32>
    %225 = vector.shape_cast %224 : vector<1x128xf32> to vector<1x1x1x128xf32>
    %226 = vector.broadcast %225 : vector<1x1x1x128xf32> to vector<1x8x8x128xf32>
    %227 = arith.mulf %223, %226 : vector<1x8x8x128xf32>
    %228 = arith.addf %222, %227 : vector<1x8x8x128xf32>
    %229 = vector.extract_strided_slice %202 {offsets = [0, 0, 0, 0], sizes = [1, 8, 8, 128], strides = [1, 1, 1, 1]} : vector<1x10x8x128xf32> to vector<1x8x8x128xf32>
    %230 = vector.extract_strided_slice %221 {offsets = [1, 0], sizes = [1, 128], strides = [1, 1]} : vector<9x128xf32> to vector<1x128xf32>
    %231 = vector.shape_cast %230 : vector<1x128xf32> to vector<1x1x1x128xf32>
    %232 = vector.broadcast %231 : vector<1x1x1x128xf32> to vector<1x8x8x128xf32>
    %233 = arith.mulf %229, %232 : vector<1x8x8x128xf32>
    %234 = arith.addf %228, %233 : vector<1x8x8x128xf32>
    %235 = vector.extract_strided_slice %220 {offsets = [0, 0, 0, 0], sizes = [1, 8, 8, 128], strides = [1, 1, 1, 1]} : vector<1x10x8x128xf32> to vector<1x8x8x128xf32>
    %236 = vector.extract_strided_slice %221 {offsets = [2, 0], sizes = [1, 128], strides = [1, 1]} : vector<9x128xf32> to vector<1x128xf32>
    %237 = vector.shape_cast %236 : vector<1x128xf32> to vector<1x1x1x128xf32>
    %238 = vector.broadcast %237 : vector<1x1x1x128xf32> to vector<1x8x8x128xf32>
    %239 = arith.mulf %235, %238 : vector<1x8x8x128xf32>
    %240 = arith.addf %234, %239 : vector<1x8x8x128xf32>
    %241 = vector.extract_strided_slice %216 {offsets = [0, 1, 0, 0], sizes = [1, 8, 8, 128], strides = [1, 1, 1, 1]} : vector<1x10x8x128xf32> to vector<1x8x8x128xf32>
    %242 = vector.extract_strided_slice %221 {offsets = [3, 0], sizes = [1, 128], strides = [1, 1]} : vector<9x128xf32> to vector<1x128xf32>
    %243 = vector.shape_cast %242 : vector<1x128xf32> to vector<1x1x1x128xf32>
    %244 = vector.broadcast %243 : vector<1x1x1x128xf32> to vector<1x8x8x128xf32>
    %245 = arith.mulf %241, %244 : vector<1x8x8x128xf32>
    %246 = arith.addf %240, %245 : vector<1x8x8x128xf32>
    %247 = vector.extract_strided_slice %202 {offsets = [0, 1, 0, 0], sizes = [1, 8, 8, 128], strides = [1, 1, 1, 1]} : vector<1x10x8x128xf32> to vector<1x8x8x128xf32>
    %248 = vector.extract_strided_slice %221 {offsets = [4, 0], sizes = [1, 128], strides = [1, 1]} : vector<9x128xf32> to vector<1x128xf32>
    %249 = vector.shape_cast %248 : vector<1x128xf32> to vector<1x1x1x128xf32>
    %250 = vector.broadcast %249 : vector<1x1x1x128xf32> to vector<1x8x8x128xf32>
    %251 = arith.mulf %247, %250 : vector<1x8x8x128xf32>
    %252 = arith.addf %246, %251 : vector<1x8x8x128xf32>
    %253 = vector.extract_strided_slice %220 {offsets = [0, 1, 0, 0], sizes = [1, 8, 8, 128], strides = [1, 1, 1, 1]} : vector<1x10x8x128xf32> to vector<1x8x8x128xf32>
    %254 = vector.extract_strided_slice %221 {offsets = [5, 0], sizes = [1, 128], strides = [1, 1]} : vector<9x128xf32> to vector<1x128xf32>
    %255 = vector.shape_cast %254 : vector<1x128xf32> to vector<1x1x1x128xf32>
    %256 = vector.broadcast %255 : vector<1x1x1x128xf32> to vector<1x8x8x128xf32>
    %257 = arith.mulf %253, %256 : vector<1x8x8x128xf32>
    %258 = arith.addf %252, %257 : vector<1x8x8x128xf32>
    %259 = vector.extract_strided_slice %216 {offsets = [0, 2, 0, 0], sizes = [1, 8, 8, 128], strides = [1, 1, 1, 1]} : vector<1x10x8x128xf32> to vector<1x8x8x128xf32>
    %260 = vector.extract_strided_slice %221 {offsets = [6, 0], sizes = [1, 128], strides = [1, 1]} : vector<9x128xf32> to vector<1x128xf32>
    %261 = vector.shape_cast %260 : vector<1x128xf32> to vector<1x1x1x128xf32>
    %262 = vector.broadcast %261 : vector<1x1x1x128xf32> to vector<1x8x8x128xf32>
    %263 = arith.mulf %259, %262 : vector<1x8x8x128xf32>
    %264 = arith.addf %258, %263 : vector<1x8x8x128xf32>
    %265 = vector.extract_strided_slice %202 {offsets = [0, 2, 0, 0], sizes = [1, 8, 8, 128], strides = [1, 1, 1, 1]} : vector<1x10x8x128xf32> to vector<1x8x8x128xf32>
    %266 = vector.extract_strided_slice %221 {offsets = [7, 0], sizes = [1, 128], strides = [1, 1]} : vector<9x128xf32> to vector<1x128xf32>
    %267 = vector.shape_cast %266 : vector<1x128xf32> to vector<1x1x1x128xf32>
    %268 = vector.broadcast %267 : vector<1x1x1x128xf32> to vector<1x8x8x128xf32>
    %269 = arith.mulf %265, %268 : vector<1x8x8x128xf32>
    %270 = arith.addf %264, %269 : vector<1x8x8x128xf32>
    %271 = vector.extract_strided_slice %220 {offsets = [0, 2, 0, 0], sizes = [1, 8, 8, 128], strides = [1, 1, 1, 1]} : vector<1x10x8x128xf32> to vector<1x8x8x128xf32>
    %272 = vector.extract_strided_slice %221 {offsets = [8, 0], sizes = [1, 128], strides = [1, 1]} : vector<9x128xf32> to vector<1x128xf32>
    %273 = vector.shape_cast %272 : vector<1x128xf32> to vector<1x1x1x128xf32>
    %274 = vector.broadcast %273 : vector<1x1x1x128xf32> to vector<1x8x8x128xf32>
    %275 = arith.mulf %271, %274 : vector<1x8x8x128xf32>
    %276 = arith.addf %270, %275 : vector<1x8x8x128xf32>
    %c0_92 = arith.constant 0 : index
    %c0_93 = arith.constant 0 : index
    %277 = vector.load %arg13[%c0_92, %c0_93] : memref<1x128xf32, #tpu.memory_space<vmem>>, vector<1x128xf32>
    %278 = vector.shape_cast %277 : vector<1x128xf32> to vector<1x1x1x128xf32>
    %279 = vector.broadcast %278 : vector<1x1x1x128xf32> to vector<1x8x8x128xf32>
    %280 = arith.addf %276, %279 : vector<1x8x8x128xf32>
    %cst_94 = arith.constant 0.000000e+00 : f32
    %281 = vector.broadcast %cst_94 : f32 to vector<1x8x8x128xf32>
    %282 = arith.maximumf %280, %281 : vector<1x8x8x128xf32>
    %283 = vector.shape_cast %282 : vector<1x8x8x128xf32> to vector<64x128xf32>
    %c0_95 = arith.constant 0 : index
    %c0_96 = arith.constant 0 : index
    %284 = vector.load %arg14[%c0_95, %c0_96] : memref<128x128xf32, #tpu.memory_space<vmem>>, vector<128x128xf32>
    %cst_97 = arith.constant dense<0.000000e+00> : vector<64x128xf32>
    %285 = tpu.matmul %283, %284, %cst_97 {dimension_numbers = #tpu.dot_dimension_numbers<[1], [0], [0], [1], [0, 0, 1, 1], [], []>} : vector<64x128xf32>, vector<128x128xf32>, vector<64x128xf32> -> vector<64x128xf32>
    %c0_98 = arith.constant 0 : index
    %c0_99 = arith.constant 0 : index
    %286 = vector.load %arg15[%c0_98, %c0_99] : memref<1x128xf32, #tpu.memory_space<vmem>>, vector<1x128xf32>
    %287 = vector.broadcast %286 : vector<1x128xf32> to vector<64x128xf32>
    %288 = arith.addf %285, %287 : vector<64x128xf32>
    %cst_100 = arith.constant 0.000000e+00 : f32
    %289 = vector.broadcast %cst_100 : f32 to vector<64x128xf32>
    %290 = arith.maximumf %288, %289 : vector<64x128xf32>
    %291 = vector.shape_cast %290 : vector<64x128xf32> to vector<1x8x8x128xf32>
    %c0_101 = arith.constant 0 : index
    %c0_102 = arith.constant 0 : index
    %c0_103 = arith.constant 0 : index
    %c0_104 = arith.constant 0 : index
    %292 = vector.load %arg16[%c0_101, %c0_102, %c0_103, %c0_104] : memref<1x8x8x128xf32, #tpu.memory_space<vmem>>, vector<1x8x8x128xf32>
    tpu.vector_store %arg16[%c0_101, %c0_102, %c0_103, %c0_104], %291 {strides = array<i32>} : memref<1x8x8x128xf32, #tpu.memory_space<vmem>>, vector<1x8x8x128xf32>,
    return
  }
  func.func @transform_0(%arg0: i32) -> (i32, i32, i32) {
    %c0_i32 = arith.constant 0 : i32
    %c0_i32_0 = arith.constant 0 : i32
    %c0_i32_1 = arith.constant 0 : i32
    return %arg0, %c0_i32, %c0_i32_0 : i32, i32, i32
  }
  func.func @transform_1(%arg0: i32) -> (i32, i32) {
    %c0_i32 = arith.constant 0 : i32
    %c0_i32_0 = arith.constant 0 : i32
    %c0_i32_1 = arith.constant 0 : i32
    return %c0_i32, %c0_i32_0 : i32, i32
  }
  func.func @transform_2(%arg0: i32) -> (i32, i32) {
    %c0_i32 = arith.constant 0 : i32
    %c0_i32_0 = arith.constant 0 : i32
    %c0_i32_1 = arith.constant 0 : i32
    return %c0_i32, %c0_i32_0 : i32, i32
  }
  func.func @transform_3(%arg0: i32) -> (i32, i32) {
    %c0_i32 = arith.constant 0 : i32
    %c0_i32_0 = arith.constant 0 : i32
    %c0_i32_1 = arith.constant 0 : i32
    return %c0_i32, %c0_i32_0 : i32, i32
  }
  func.func @transform_4(%arg0: i32) -> (i32, i32) {
    %c0_i32 = arith.constant 0 : i32
    %c0_i32_0 = arith.constant 0 : i32
    %c0_i32_1 = arith.constant 0 : i32
    return %c0_i32, %c0_i32_0 : i32, i32
  }
  func.func @transform_5(%arg0: i32) -> (i32, i32) {
    %c0_i32 = arith.constant 0 : i32
    %c0_i32_0 = arith.constant 0 : i32
    %c0_i32_1 = arith.constant 0 : i32
    return %c0_i32, %c0_i32_0 : i32, i32
  }
  func.func @transform_6(%arg0: i32) -> (i32, i32) {
    %c0_i32 = arith.constant 0 : i32
    %c0_i32_0 = arith.constant 0 : i32
    %c0_i32_1 = arith.constant 0 : i32
    return %c0_i32, %c0_i32_0 : i32, i32
  }
  func.func @transform_7(%arg0: i32) -> (i32, i32) {
    %c0_i32 = arith.constant 0 : i32
    %c0_i32_0 = arith.constant 0 : i32
    %c0_i32_1 = arith.constant 0 : i32
    return %c0_i32, %c0_i32_0 : i32, i32
  }
  func.func @transform_8(%arg0: i32) -> (i32, i32) {
    %c0_i32 = arith.constant 0 : i32
    %c0_i32_0 = arith.constant 0 : i32
    %c0_i32_1 = arith.constant 0 : i32
    return %c0_i32, %c0_i32_0 : i32, i32
  }
  func.func @transform_9(%arg0: i32) -> (i32, i32) {
    %c0_i32 = arith.constant 0 : i32
    %c0_i32_0 = arith.constant 0 : i32
    %c0_i32_1 = arith.constant 0 : i32
    return %c0_i32, %c0_i32_0 : i32, i32
  }
  func.func @transform_10(%arg0: i32) -> (i32, i32) {
    %c0_i32 = arith.constant 0 : i32
    %c0_i32_0 = arith.constant 0 : i32
    %c0_i32_1 = arith.constant 0 : i32
    return %c0_i32, %c0_i32_0 : i32, i32
  }
  func.func @transform_11(%arg0: i32) -> (i32, i32) {
    %c0_i32 = arith.constant 0 : i32
    %c0_i32_0 = arith.constant 0 : i32
    %c0_i32_1 = arith.constant 0 : i32
    return %c0_i32, %c0_i32_0 : i32, i32
  }
  func.func @transform_12(%arg0: i32) -> (i32, i32) {
    %c0_i32 = arith.constant 0 : i32
    %c0_i32_0 = arith.constant 0 : i32
    %c0_i32_1 = arith.constant 0 : i32
    return %c0_i32, %c0_i32_0 : i32, i32
  }
  func.func @transform_13(%arg0: i32) -> (i32, i32) {
    %c0_i32 = arith.constant 0 : i32
    %c0_i32_0 = arith.constant 0 : i32
    %c0_i32_1 = arith.constant 0 : i32
    return %c0_i32, %c0_i32_0 : i32, i32
  }
  func.func @transform_14(%arg0: i32) -> (i32, i32) {
    %c0_i32 = arith.constant 0 : i32
    %c0_i32_0 = arith.constant 0 : i32
    %c0_i32_1 = arith.constant 0 : i32
    return %c0_i32, %c0_i32_0 : i32, i32
  }
  func.func @transform_15(%arg0: i32) -> (i32, i32, i32, i32) {
    %c0_i32 = arith.constant 0 : i32
    %c0_i32_0 = arith.constant 0 : i32
    %c0_i32_1 = arith.constant 0 : i32
    %c0_i32_2 = arith.constant 0 : i32
    return %arg0, %c0_i32, %c0_i32_0, %c0_i32_1 : i32, i32, i32, i32
  }
}

</mosaic_0001>

<llo_original>
// kernel: _lambda_.1
$region0: #{_lambda_.1}
  #allocation0 [shape = 'u32[]', space=smem, size = 0x4, offset = 0x4, fixed_abs, tag = 'smem constant byte address 0x4 - core index']
  #allocation1 [shape = 'u32[144,128]{1,0:T(1,128)}', space=vmem, size = 0x12000, scoped, tag = 'internal scratch']
  #allocation2 [shape = 'f32[1,10,8,32]{3,2,1,0:T(8,128)}', space=vmem, size = 0xa000, scoped, tag = 'scratch operand']
  #allocation3 [shape = 'f32[1,10,8,64]{3,2,1,0:T(8,128)}', space=vmem, size = 0xa000, scoped, tag = 'scratch operand']
  #allocation4 [shape = 'f32[1,10,8,128]{3,2,1,0:T(8,128)}', space=vmem, size = 0xa000, scoped, tag = 'scratch operand']
  %s0 = inlined_call_operand.vmem [shape: f32[2,64,27], index: 0, kind: input, shape index: {}]
  %s1 = inlined_call_operand.vmem [shape: f32[27,32], index: 1, kind: input, shape index: {}]
  %s2 = inlined_call_operand.vmem [shape: f32[1,32], index: 2, kind: input, shape index: {}]
  %s3 = inlined_call_operand.vmem [shape: f32[9,32], index: 3, kind: input, shape index: {}]
  %s4 = inlined_call_operand.vmem [shape: f32[1,32], index: 4, kind: input, shape index: {}]
  %s5 = inlined_call_operand.vmem [shape: f32[32,64], index: 5, kind: input, shape index: {}]
  %s6 = inlined_call_operand.vmem [shape: f32[1,64], index: 6, kind: input, shape index: {}]
  %s7 = inlined_call_operand.vmem [shape: f32[9,64], index: 7, kind: input, shape index: {}]
  %s8 = inlined_call_operand.vmem [shape: f32[1,64], index: 8, kind: input, shape index: {}]
  %s9 = inlined_call_operand.vmem [shape: f32[64,128], index: 9, kind: input, shape index: {}]
  %s10 = inlined_call_operand.vmem [shape: f32[1,128], index: 10, kind: input, shape index: {}]
  %s11 = inlined_call_operand.vmem [shape: f32[9,128], index: 11, kind: input, shape index: {}]
  %s12 = inlined_call_operand.vmem [shape: f32[1,128], index: 12, kind: input, shape index: {}]
  %s13 = inlined_call_operand.vmem [shape: f32[128,128], index: 13, kind: input, shape index: {}]
  %s14 = inlined_call_operand.vmem [shape: f32[1,128], index: 14, kind: input, shape index: {}]
  %s15 = inlined_call_operand.hbm [shape: f32[2,8,8,128], index: 15, kind: output, shape index: {}]
  %s16 = sld [smem:[#allocation0]]
  $region93: #{_lambda_.1} parent=0
    _
  %s18 = ssub.s32 1, %s16
  %s19 = scalar_select 0, %s18, %s16
  $region1: #{_lambda_.1} parent=0
    #allocation5 [shape = 'u8[65536]{0}', space=vmem, size = 0x10000, scoped, tag = 'output window, operand 0']
    #allocation6 [shape = 's32[2]{0}', space=sflag, size = 0x8, scoped, tag = 'scoped memory for _lambda_.1']
    %20 = vsyncpa [#allocation6], 0
    %s21 = scalar_lea.sflag [#allocation6], 1
    %22 = vsyncpa %s21, 0
    loop: start=0, step=1, limit=4
    $region2: #{_lambda_.1} parent=1 // loop_pre_header
      _
    $region3: #{_lambda_.1} parent=1 // loop_header
      %s24 = sphi 0, %s28
      %p25 = scmp.ge.s32.totalorder %s24, 4
      %s34 = sphi 0, %s36
      %s37 = sphi 0, %s34
      %s38 = sphi 0, %s37
      %s54 = sphi 0, %s38
      %s58 = sphi 0, %s58
      %s60 = sphi 0, %s58
      %s61 = sphi 0, %s60
      %s75 = sphi 0, %s61
      %s79 = sphi 0, %s79
      %s81 = sphi 0, %s79
      %s82 = sphi 0, %s81
      %s96 = sphi 0, %s82
      %s100 = sphi 0, %s100
      %s102 = sphi 0, %s100
      %s103 = sphi 0, %s102
      %s117 = sphi 0, %s103
      %s121 = sphi 0, %s121
      %s123 = sphi 0, %s121
      %s124 = sphi 0, %s123
      %s138 = sphi 0, %s124
      %s142 = sphi 0, %s142
      %s144 = sphi 0, %s142
      %s145 = sphi 0, %s144
      %s159 = sphi 0, %s145
      %s163 = sphi 0, %s163
      %s165 = sphi 0, %s163
      %s166 = sphi 0, %s165
      %s180 = sphi 0, %s166
      %s184 = sphi 0, %s184
      %s186 = sphi 0, %s184
      %s187 = sphi 0, %s186
      %s201 = sphi 0, %s187
      %s205 = sphi 0, %s205
      %s207 = sphi 0, %s205
      %s208 = sphi 0, %s207
      %s222 = sphi 0, %s208
      %s226 = sphi 0, %s226
      %s228 = sphi 0, %s226
      %s229 = sphi 0, %s228
      %s243 = sphi 0, %s229
      %s247 = sphi 0, %s247
      %s249 = sphi 0, %s247
      %s250 = sphi 0, %s249
      %s264 = sphi 0, %s250
      %s268 = sphi 0, %s268
      %s270 = sphi 0, %s268
      %s271 = sphi 0, %s270
      %s285 = sphi 0, %s271
      %s289 = sphi 0, %s289
      %s291 = sphi 0, %s289
      %s292 = sphi 0, %s291
      %s306 = sphi 0, %s292
      %s310 = sphi 0, %s310
      %s312 = sphi 0, %s310
      %s313 = sphi 0, %s312
      %s327 = sphi 0, %s313
      %s331 = sphi 0, %s331
      %s333 = sphi 0, %s331
      %s334 = sphi 0, %s333
      %s348 = sphi 0, %s334
      %s354 = sphi 0, %s356
      %s357 = sphi 0, %s354
      %s358 = sphi 0, %s357
      %s374 = sphi 0, %s358
    $region4: #{_lambda_.1} parent=1 // loop_header_branch
      %27 = sbr.rel (%p25) target = $region8
    $region5: #{_lambda_.1} parent=1 // loop_body
      %s29 = ssub.s32 %s24, 1
      %s30 = ssub.s32 %s24, 2
      %s31 = sadd.s32 %s24, 1
      %s32 = ssub.s32 %s24, %s31
      %p33 = scmp.eq.s32.totalorder %s32, 0
      %s35 = sadd.s32 %s34, 1
      %s36 = scalar_select %p33, %s34, %s35
      %p39 = pneg %p33
      %p40 = scmp.eq.s32.totalorder %s24, 1
      %p41 = por %p39, %p40
      %p42 = scmp.ne.s32.totalorder %s34, %s37
      %p43 = scmp.eq.s32.totalorder %s24, 0
      %p44 = por %p42, %p43
      %p45 = scmp.ne.s32.totalorder %s34, %s37
      %p46 = scmp.eq.s32.totalorder %s29, 1
      %p47 = por %p45, %p46
      %p48 = scmp.ne.s32.totalorder %s37, %s38
      %p49 = scmp.eq.s32.totalorder %s29, 0
      %p50 = por %p48, %p49
      %p51 = scmp.ne.s32.totalorder %s37, %s38
      %p52 = scmp.eq.s32.totalorder %s30, 1
      %p53 = por %p51, %p52
      %p55 = scmp.ne.s32.totalorder %s38, %s54
      %p56 = scmp.eq.s32.totalorder %s30, 0
      %p57 = por %p55, %p56
      %s59 = sadd.s32 %s58, 1
      %p62 = scmp.eq.s32.totalorder %s24, 1
      %p63 = scmp.ne.s32.totalorder %s58, %s60
      %p64 = scmp.eq.s32.totalorder %s24, 0
      %p65 = por %p63, %p64
      %p66 = scmp.ne.s32.totalorder %s58, %s60
      %p67 = scmp.eq.s32.totalorder %s29, 1
      %p68 = por %p66, %p67
      %p69 = scmp.ne.s32.totalorder %s60, %s61
      %p70 = scmp.eq.s32.totalorder %s29, 0
      %p71 = por %p69, %p70
      %p72 = scmp.ne.s32.totalorder %s60, %s61
      %p73 = scmp.eq.s32.totalorder %s30, 1
      %p74 = por %p72, %p73
      %p76 = scmp.ne.s32.totalorder %s61, %s75
      %p77 = scmp.eq.s32.totalorder %s30, 0
      %p78 = por %p76, %p77
      %s80 = sadd.s32 %s79, 1
      %p83 = scmp.eq.s32.totalorder %s24, 1
      %p84 = scmp.ne.s32.totalorder %s79, %s81
      %p85 = scmp.eq.s32.totalorder %s24, 0
      %p86 = por %p84, %p85
      %p87 = scmp.ne.s32.totalorder %s79, %s81
      %p88 = scmp.eq.s32.totalorder %s29, 1
      %p89 = por %p87, %p88
      %p90 = scmp.ne.s32.totalorder %s81, %s82
      %p91 = scmp.eq.s32.totalorder %s29, 0
      %p92 = por %p90, %p91
      %p93 = scmp.ne.s32.totalorder %s81, %s82
      %p94 = scmp.eq.s32.totalorder %s30, 1
      %p95 = por %p93, %p94
      %p97 = scmp.ne.s32.totalorder %s82, %s96
      %p98 = scmp.eq.s32.totalorder %s30, 0
      %p99 = por %p97, %p98
      %s101 = sadd.s32 %s100, 1
      %p104 = scmp.eq.s32.totalorder %s24, 1
      %p105 = scmp.ne.s32.totalorder %s100, %s102
      %p106 = scmp.eq.s32.totalorder %s24, 0
      %p107 = por %p105, %p106
      %p108 = scmp.ne.s32.totalorder %s100, %s102
      %p109 = scmp.eq.s32.totalorder %s29, 1
      %p110 = por %p108, %p109
      %p111 = scmp.ne.s32.totalorder %s102, %s103
      %p112 = scmp.eq.s32.totalorder %s29, 0
      %p113 = por %p111, %p112
      %p114 = scmp.ne.s32.totalorder %s102, %s103
      %p115 = scmp.eq.s32.totalorder %s30, 1
      %p116 = por %p114, %p115
      %p118 = scmp.ne.s32.totalorder %s103, %s117
      %p119 = scmp.eq.s32.totalorder %s30, 0
      %p120 = por %p118, %p119
      %s122 = sadd.s32 %s121, 1
      %p125 = scmp.eq.s32.totalorder %s24, 1
      %p126 = scmp.ne.s32.totalorder %s121, %s123
      %p127 = scmp.eq.s32.totalorder %s24, 0
      %p128 = por %p126, %p127
      %p129 = scmp.ne.s32.totalorder %s121, %s123
      %p130 = scmp.eq.s32.totalorder %s29, 1
      %p131 = por %p129, %p130
      %p132 = scmp.ne.s32.totalorder %s123, %s124
      %p133 = scmp.eq.s32.totalorder %s29, 0
      %p134 = por %p132, %p133
      %p135 = scmp.ne.s32.totalorder %s123, %s124
      %p136 = scmp.eq.s32.totalorder %s30, 1
      %p137 = por %p135, %p136
      %p139 = scmp.ne.s32.totalorder %s124, %s138
      %p140 = scmp.eq.s32.totalorder %s30, 0
      %p141 = por %p139, %p140
      %s143 = sadd.s32 %s142, 1
      %p146 = scmp.eq.s32.totalorder %s24, 1
      %p147 = scmp.ne.s32.totalorder %s142, %s144
      %p148 = scmp.eq.s32.totalorder %s24, 0
      %p149 = por %p147, %p148
      %p150 = scmp.ne.s32.totalorder %s142, %s144
      %p151 = scmp.eq.s32.totalorder %s29, 1
      %p152 = por %p150, %p151
      %p153 = scmp.ne.s32.totalorder %s144, %s145
      %p154 = scmp.eq.s32.totalorder %s29, 0
      %p155 = por %p153, %p154
      %p156 = scmp.ne.s32.totalorder %s144, %s145
      %p157 = scmp.eq.s32.totalorder %s30, 1
      %p158 = por %p156, %p157
      %p160 = scmp.ne.s32.totalorder %s145, %s159
      %p161 = scmp.eq.s32.totalorder %s30, 0
      %p162 = por %p160, %p161
      %s164 = sadd.s32 %s163, 1
      %p167 = scmp.eq.s32.totalorder %s24, 1
      %p168 = scmp.ne.s32.totalorder %s163, %s165
      %p169 = scmp.eq.s32.totalorder %s24, 0
      %p170 = por %p168, %p169
      %p171 = scmp.ne.s32.totalorder %s163, %s165
      %p172 = scmp.eq.s32.totalorder %s29, 1
      %p173 = por %p171, %p172
      %p174 = scmp.ne.s32.totalorder %s165, %s166
      %p175 = scmp.eq.s32.totalorder %s29, 0
      %p176 = por %p174, %p175
      %p177 = scmp.ne.s32.totalorder %s165, %s166
      %p178 = scmp.eq.s32.totalorder %s30, 1
      %p179 = por %p177, %p178
      %p181 = scmp.ne.s32.totalorder %s166, %s180
      %p182 = scmp.eq.s32.totalorder %s30, 0
      %p183 = por %p181, %p182
      %s185 = sadd.s32 %s184, 1
      %p188 = scmp.eq.s32.totalorder %s24, 1
      %p189 = scmp.ne.s32.totalorder %s184, %s186
      %p190 = scmp.eq.s32.totalorder %s24, 0
      %p191 = por %p189, %p190
      %p192 = scmp.ne.s32.totalorder %s184, %s186
      %p193 = scmp.eq.s32.totalorder %s29, 1
      %p194 = por %p192, %p193
      %p195 = scmp.ne.s32.totalorder %s186, %s187
      %p196 = scmp.eq.s32.totalorder %s29, 0
      %p197 = por %p195, %p196
      %p198 = scmp.ne.s32.totalorder %s186, %s187
      %p199 = scmp.eq.s32.totalorder %s30, 1
      %p200 = por %p198, %p199
      %p202 = scmp.ne.s32.totalorder %s187, %s201
      %p203 = scmp.eq.s32.totalorder %s30, 0
      %p204 = por %p202, %p203
      %s206 = sadd.s32 %s205, 1
      %p209 = scmp.eq.s32.totalorder %s24, 1
      %p210 = scmp.ne.s32.totalorder %s205, %s207
      %p211 = scmp.eq.s32.totalorder %s24, 0
      %p212 = por %p210, %p211
      %p213 = scmp.ne.s32.totalorder %s205, %s207
      %p214 = scmp.eq.s32.totalorder %s29, 1
      %p215 = por %p213, %p214
      %p216 = scmp.ne.s32.totalorder %s207, %s208
      %p217 = scmp.eq.s32.totalorder %s29, 0
      %p218 = por %p216, %p217
      %p219 = scmp.ne.s32.totalorder %s207, %s208
      %p220 = scmp.eq.s32.totalorder %s30, 1
      %p221 = por %p219, %p220
      %p223 = scmp.ne.s32.totalorder %s208, %s222
      %p224 = scmp.eq.s32.totalorder %s30, 0
      %p225 = por %p223, %p224
      %s227 = sadd.s32 %s226, 1
      %p230 = scmp.eq.s32.totalorder %s24, 1
      %p231 = scmp.ne.s32.totalorder %s226, %s228
      %p232 = scmp.eq.s32.totalorder %s24, 0
      %p233 = por %p231, %p232
      %p234 = scmp.ne.s32.totalorder %s226, %s228
      %p235 = scmp.eq.s32.totalorder %s29, 1
      %p236 = por %p234, %p235
      %p237 = scmp.ne.s32.totalorder %s228, %s229
      %p238 = scmp.eq.s32.totalorder %s29, 0
      %p239 = por %p237, %p238
      %p240 = scmp.ne.s32.totalorder %s228, %s229
      %p241 = scmp.eq.s32.totalorder %s30, 1
      %p242 = por %p240, %p241
      %p244 = scmp.ne.s32.totalorder %s229, %s243
      %p245 = scmp.eq.s32.totalorder %s30, 0
      %p246 = por %p244, %p245
      %s248 = sadd.s32 %s247, 1
      %p251 = scmp.eq.s32.totalorder %s24, 1
      %p252 = scmp.ne.s32.totalorder %s247, %s249
      %p253 = scmp.eq.s32.totalorder %s24, 0
      %p254 = por %p252, %p253
      %p255 = scmp.ne.s32.totalorder %s247, %s249
      %p256 = scmp.eq.s32.totalorder %s29, 1
      %p257 = por %p255, %p256
      %p258 = scmp.ne.s32.totalorder %s249, %s250
      %p259 = scmp.eq.s32.totalorder %s29, 0
      %p260 = por %p258, %p259
      %p261 = scmp.ne.s32.totalorder %s249, %s250
      %p262 = scmp.eq.s32.totalorder %s30, 1
      %p263 = por %p261, %p262
      %p265 = scmp.ne.s32.totalorder %s250, %s264
      %p266 = scmp.eq.s32.totalorder %s30, 0
      %p267 = por %p265, %p266
      %s269 = sadd.s32 %s268, 1
      %p272 = scmp.eq.s32.totalorder %s24, 1
      %p273 = scmp.ne.s32.totalorder %s268, %s270
      %p274 = scmp.eq.s32.totalorder %s24, 0
      %p275 = por %p273, %p274
      %p276 = scmp.ne.s32.totalorder %s268, %s270
      %p277 = scmp.eq.s32.totalorder %s29, 1
      %p278 = por %p276, %p277
      %p279 = scmp.ne.s32.totalorder %s270, %s271
      %p280 = scmp.eq.s32.totalorder %s29, 0
      %p281 = por %p279, %p280
      %p282 = scmp.ne.s32.totalorder %s270, %s271
      %p283 = scmp.eq.s32.totalorder %s30, 1
      %p284 = por %p282, %p283
      %p286 = scmp.ne.s32.totalorder %s271, %s285
      %p287 = scmp.eq.s32.totalorder %s30, 0
      %p288 = por %p286, %p287
      %s290 = sadd.s32 %s289, 1
      %p293 = scmp.eq.s32.totalorder %s24, 1
      %p294 = scmp.ne.s32.totalorder %s289, %s291
      %p295 = scmp.eq.s32.totalorder %s24, 0
      %p296 = por %p294, %p295
      %p297 = scmp.ne.s32.totalorder %s289, %s291
      %p298 = scmp.eq.s32.totalorder %s29, 1
      %p299 = por %p297, %p298
      %p300 = scmp.ne.s32.totalorder %s291, %s292
      %p301 = scmp.eq.s32.totalorder %s29, 0
      %p302 = por %p300, %p301
      %p303 = scmp.ne.s32.totalorder %s291, %s292
      %p304 = scmp.eq.s32.totalorder %s30, 1
      %p305 = por %p303, %p304
      %p307 = scmp.ne.s32.totalorder %s292, %s306
      %p308 = scmp.eq.s32.totalorder %s30, 0
      %p309 = por %p307, %p308
      %s311 = sadd.s32 %s310, 1
      %p314 = scmp.eq.s32.totalorder %s24, 1
      %p315 = scmp.ne.s32.totalorder %s310, %s312
      %p316 = scmp.eq.s32.totalorder %s24, 0
      %p317 = por %p315, %p316
      %p318 = scmp.ne.s32.totalorder %s310, %s312
      %p319 = scmp.eq.s32.totalorder %s29, 1
      %p320 = por %p318, %p319
      %p321 = scmp.ne.s32.totalorder %s312, %s313
      %p322 = scmp.eq.s32.totalorder %s29, 0
      %p323 = por %p321, %p322
      %p324 = scmp.ne.s32.totalorder %s312, %s313
      %p325 = scmp.eq.s32.totalorder %s30, 1
      %p326 = por %p324, %p325
      %p328 = scmp.ne.s32.totalorder %s313, %s327
      %p329 = scmp.eq.s32.totalorder %s30, 0
      %p330 = por %p328, %p329
      %s332 = sadd.s32 %s331, 1
      %p335 = scmp.eq.s32.totalorder %s24, 1
      %p336 = scmp.ne.s32.totalorder %s331, %s333
      %p337 = scmp.eq.s32.totalorder %s24, 0
      %p338 = por %p336, %p337
      %p339 = scmp.ne.s32.totalorder %s331, %s333
      %p340 = scmp.eq.s32.totalorder %s29, 1
      %p341 = por %p339, %p340
      %p342 = scmp.ne.s32.totalorder %s333, %s334
      %p343 = scmp.eq.s32.totalorder %s29, 0
      %p344 = por %p342, %p343
      %p345 = scmp.ne.s32.totalorder %s333, %s334
      %p346 = scmp.eq.s32.totalorder %s30, 1
      %p347 = por %p345, %p346
      %p349 = scmp.ne.s32.totalorder %s334, %s348
      %p350 = scmp.eq.s32.totalorder %s30, 0
      %p351 = por %p349, %p350
      %s352 = ssub.s32 %s24, %s31
      %p353 = scmp.eq.s32.totalorder %s352, 0
      %s355 = sadd.s32 %s354, 1
      %s356 = scalar_select %p353, %s354, %s355
      %p359 = pneg %p353
      %p360 = scmp.eq.s32.totalorder %s24, 1
      %p361 = por %p359, %p360
      %p362 = scmp.ne.s32.totalorder %s354, %s357
      %p363 = scmp.eq.s32.totalorder %s24, 0
      %p364 = por %p362, %p363
      %p365 = scmp.ne.s32.totalorder %s354, %s357
      %p366 = scmp.eq.s32.totalorder %s29, 1
      %p367 = por %p365, %p366
      %p368 = scmp.ne.s32.totalorder %s357, %s358
      %p369 = scmp.eq.s32.totalorder %s29, 0
      %p370 = por %p368, %p369
      %p371 = scmp.ne.s32.totalorder %s357, %s358
      %p372 = scmp.eq.s32.totalorder %s30, 1
      %p373 = por %p371, %p372
      %p375 = scmp.ne.s32.totalorder %s358, %s374
      %p376 = scmp.eq.s32.totalorder %s30, 0
      %p377 = por %p375, %p376
      %p378 = scmp.le.s32.totalorder 1, %s24
      %p379 = scmp.lt.s32.totalorder %s24, 3
      %p380 = pnand %p378, %p379
      %p381 = pneg %p380
      // Predicated region
      $region9: #{_lambda_.1} parent=5 // pred_check
        _
      $region10: #{_lambda_.1} parent=5 // pred_check_branch
        %383 = sbr.rel (%p380) target = $region12
      $region11: #{_lambda_.1} parent=5 // pred_region
        %s384 = ssub.s32 %s24, 1
        // Predicated region
        $region13: #{_lambda_.1} parent=11 // pred_check
          %p385 = pneg %p71
        $region14: #{_lambda_.1} parent=11 // pred_check_branch
          %387 = sbr.rel (%p385) target = $region16
        $region15: #{_lambda_.1} parent=11 // pred_region
          _
        $region16: #{_lambda_.1} parent=11 // pred_fallthru
          _
        // Predicated region
        $region17: #{_lambda_.1} parent=11 // pred_check
          %p388 = pneg %p92
        $region18: #{_lambda_.1} parent=11 // pred_check_branch
          %390 = sbr.rel (%p388) target = $region20
        $region19: #{_lambda_.1} parent=11 // pred_region
          _
        $region20: #{_lambda_.1} parent=11 // pred_fallthru
          _
        // Predicated region
        $region21: #{_lambda_.1} parent=11 // pred_check
          %p391 = pneg %p113
        $region22: #{_lambda_.1} parent=11 // pred_check_branch
          %393 = sbr.rel (%p391) target = $region24
        $region23: #{_lambda_.1} parent=11 // pred_region
          _
        $region24: #{_lambda_.1} parent=11 // pred_fallthru
          _
        // Predicated region
        $region25: #{_lambda_.1} parent=11 // pred_check
          %p394 = pneg %p134
        $region26: #{_lambda_.1} parent=11 // pred_check_branch
          %396 = sbr.rel (%p394) target = $region28
        $region27: #{_lambda_.1} parent=11 // pred_region
          _
        $region28: #{_lambda_.1} parent=11 // pred_fallthru
          _
        // Predicated region
        $region29: #{_lambda_.1} parent=11 // pred_check
          %p397 = pneg %p155
        $region30: #{_lambda_.1} parent=11 // pred_check_branch
          %399 = sbr.rel (%p397) target = $region32
        $region31: #{_lambda_.1} parent=11 // pred_region
          _
        $region32: #{_lambda_.1} parent=11 // pred_fallthru
          _
        // Predicated region
        $region33: #{_lambda_.1} parent=11 // pred_check
          %p400 = pneg %p176
        $region34: #{_lambda_.1} parent=11 // pred_check_branch
          %402 = sbr.rel (%p400) target = $region36
        $region35: #{_lambda_.1} parent=11 // pred_region
          _
        $region36: #{_lambda_.1} parent=11 // pred_fallthru
          _
        // Predicated region
        $region37: #{_lambda_.1} parent=11 // pred_check
          %p403 = pneg %p197
        $region38: #{_lambda_.1} parent=11 // pred_check_branch
          %405 = sbr.rel (%p403) target = $region40
        $region39: #{_lambda_.1} parent=11 // pred_region
          _
        $region40: #{_lambda_.1} parent=11 // pred_fallthru
          _
        // Predicated region
        $region41: #{_lambda_.1} parent=11 // pred_check
          %p406 = pneg %p218
        $region42: #{_lambda_.1} parent=11 // pred_check_branch
          %408 = sbr.rel (%p406) target = $region44
        $region43: #{_lambda_.1} parent=11 // pred_region
          _
        $region44: #{_lambda_.1} parent=11 // pred_fallthru
          _
        // Predicated region
        $region45: #{_lambda_.1} parent=11 // pred_check
          %p409 = pneg %p239
        $region46: #{_lambda_.1} parent=11 // pred_check_branch
          %411 = sbr.rel (%p409) target = $region48
        $region47: #{_lambda_.1} parent=11 // pred_region
          _
        $region48: #{_lambda_.1} parent=11 // pred_fallthru
          _
        // Predicated region
        $region49: #{_lambda_.1} parent=11 // pred_check
          %p412 = pneg %p260
        $region50: #{_lambda_.1} parent=11 // pred_check_branch
          %414 = sbr.rel (%p412) target = $region52
        $region51: #{_lambda_.1} parent=11 // pred_region
          _
        $region52: #{_lambda_.1} parent=11 // pred_fallthru
          _
        // Predicated region
        $region53: #{_lambda_.1} parent=11 // pred_check
          %p415 = pneg %p281
        $region54: #{_lambda_.1} parent=11 // pred_check_branch
          %417 = sbr.rel (%p415) target = $region56
        $region55: #{_lambda_.1} parent=11 // pred_region
          _
        $region56: #{_lambda_.1} parent=11 // pred_fallthru
          _
        // Predicated region
        $region57: #{_lambda_.1} parent=11 // pred_check
          %p418 = pneg %p302
        $region58: #{_lambda_.1} parent=11 // pred_check_branch
          %420 = sbr.rel (%p418) target = $region60
        $region59: #{_lambda_.1} parent=11 // pred_region
          _
        $region60: #{_lambda_.1} parent=11 // pred_fallthru
          _
        // Predicated region
        $region61: #{_lambda_.1} parent=11 // pred_check
          %p421 = pneg %p323
        $region62: #{_lambda_.1} parent=11 // pred_check_branch
          %423 = sbr.rel (%p421) target = $region64
        $region63: #{_lambda_.1} parent=11 // pred_region
          _
        $region64: #{_lambda_.1} parent=11 // pred_fallthru
          _
        // Predicated region
        $region65: #{_lambda_.1} parent=11 // pred_check
          %p424 = pneg %p344
        $region66: #{_lambda_.1} parent=11 // pred_check_branch
          %426 = sbr.rel (%p424) target = $region68
        $region67: #{_lambda_.1} parent=11 // pred_region
          _
        $region68: #{_lambda_.1} parent=11 // pred_fallthru
          _
      $region12: #{_lambda_.1} parent=5 // pred_fallthru
        _
      %p427 = scmp.lt.s32.totalorder %s24, 2
      // Predicated region
      $region69: #{_lambda_.1} parent=5 // pred_check
        %p428 = pneg %p427
      $region70: #{_lambda_.1} parent=5 // pred_check_branch
        %430 = sbr.rel (%p428) target = $region72
      $region71: #{_lambda_.1} parent=5 // pred_region
        // Predicated region
        $region73: #{_lambda_.1} parent=71 // pred_check
          %p431 = pneg %p44
        $region74: #{_lambda_.1} parent=71 // pred_check_branch
          %433 = sbr.rel (%p431) target = $region76
        $region75: #{_lambda_.1} parent=71 // pred_region
          %p434 = scmp.lt.s32.totalorder %s24, 1
          %s435 = scalar_select %p434, %s24, 1
          %s436 = smul.addr %s435, 8
          %s437 = smul.addr %s436, 8
          %s438 = scalar_lea.vmem %s0, %s437
        $region76: #{_lambda_.1} parent=71 // pred_fallthru
          _
      $region72: #{_lambda_.1} parent=5 // pred_fallthru
        _
      %p439 = scmp.le.s32.totalorder 1, %s24
      %p440 = scmp.lt.s32.totalorder %s24, 3
      %p441 = pnand %p439, %p440
      %p442 = pneg %p441
      // Predicated region
      $region77: #{_lambda_.1} parent=5 // pred_check
        _
      $region78: #{_lambda_.1} parent=5 // pred_check_branch
        %444 = sbr.rel (%p441) target = $region80
      $region79: #{_lambda_.1} parent=5 // pred_region
        %s445 = ssub.s32 %s24, 1
        %p446 = scmp.lt.s32.totalorder %s29, 1
        %s447 = scalar_select %p446, %s29, 1
        %s448 = smul.addr %s447, 8
        %s449 = smul.addr %s448, 8
        %s450 = scalar_lea.vmem %s0, %s449
        %p451 = pneg %p50
        %p452 = pneg %p47
        %p453 = pneg %p71
        %p454 = pneg %p68
        %p455 = pneg %p92
        %p456 = pneg %p89
        %p457 = pneg %p113
        %p458 = pneg %p110
        %p459 = pneg %p134
        %p460 = pneg %p131
        %p461 = pneg %p155
        %p462 = pneg %p152
        %p463 = pneg %p176
        %p464 = pneg %p173
        %p465 = pneg %p197
        %p466 = pneg %p194
        %p467 = pneg %p218
        %p468 = pneg %p215
        %p469 = pneg %p239
        %p470 = pneg %p236
        %p471 = pneg %p260
        %p472 = pneg %p257
        %p473 = pneg %p281
        %p474 = pneg %p278
        %p475 = pneg %p302
        %p476 = pneg %p299
        %p477 = pneg %p323
        %p478 = pneg %p320
        %p479 = pneg %p344
        %p480 = pneg %p341
        %p481 = pneg %p370
        %p482 = pneg %p367
        %s483 = sand.u32 %s357, 1
        %s484 = scalar_lea.sflag [#allocation6], %s483
        %s485 = sand.u32 %s357, 1
        %s486 = smul.addr %s485, 64
        %s487 = scalar_lea.vmem [#allocation5], %s486
        %p488 = scmp.lt.s32.totalorder %s29, 1
        %s489 = scalar_select %p488, %s29, 1
        %s490 = smul.addr %s489, 8
        %s491 = smul.addr %s490, 8
        %s492 = scalar_lea.vmem %s0, %s491
        %v493 = vld [vmem:[%s492] sm:$0xff]
        %v494 = vld [vmem:[%s492 + $0x8] sm:$0xff]
        %v495 = vld [vmem:[%s492 + $0x10] sm:$0xff]
        %v496 = vld [vmem:[%s492 + $0x18] sm:$0xff]
        %v497 = vld [vmem:[%s492 + $0x20] sm:$0xff]
        %v498 = vld [vmem:[%s492 + $0x28] sm:$0xff]
        %v499 = vld [vmem:[%s492 + $0x30] sm:$0xff]
        %v500 = vld [vmem:[%s492 + $0x38] sm:$0xff]
        %v501 = vld [vmem:[%s1] sm:$0xff]
        %v502 = vld [vmem:[%s1 + $0x8] sm:$0xff]
        %v503 = vld [vmem:[%s1 + $0x10] sm:$0xff]
        %v504 = vld [vmem:[%s1 + $0x18] sm:$0x7]
        %v505 = vld [vmem:[%s2] sm:$0x1]
        %v507 = vlaneseq
        %v508 = vshrl.u32 %v507, 7
        %v509 = vsub.s32 0, %v508
        %v510 = vrot.slane %v505, %v509
        %vm512 = vcmask 220160
        %v514 = vsel %vm512, %v493, 0
        %v517 = vsel %vm512, %v494, 0
        %v520 = vsel %vm512, %v495, 0
        %v523 = vsel %vm512, %v496, 0
        %v526 = vsel %vm512, %v497, 0
        %v529 = vsel %vm512, %v498, 0
        %v532 = vsel %vm512, %v499, 0
        %v535 = vsel %vm512, %v500, 0
        %vm537 = vcmask 1042432
        %v539 = vsel %vm537, %v504, 0
        %541 = vmatprep.subr.mxu0 0.0
        %542 = vmatpush1.msra.mxu0 %v501
        %543 = vmatprep.subr.mxu0 0.0
        %544 = vmatpush1.msra.mxu0 %v502
        %545 = vmatprep.subr.mxu0 0.0
        %546 = vmatpush1.msra.mxu0 %v503
        %547 = vmatprep.subr.mxu0 0.0
        %548 = vmatpush1.msra.mxu0 %v539
        %549 = vmatprep.subr.mxu0 0.0
        %550 = vmatpush1.msra.mxu0 0.0
        %551 = vmatprep.subr.mxu0 0.0
        %552 = vmatpush1.msra.mxu0 0.0
        %553 = vmatprep.subr.mxu0 0.0
        %554 = vmatpush1.msra.mxu0 0.0
        %555 = vmatprep.subr.mxu0 0.0
        %556 = vmatpush1.msra.mxu0 0.0
        %557 = vmatprep.subr.mxu0 0.0
        %558 = vmatpush1.msra.mxu0 0.0
        %559 = vmatprep.subr.mxu0 0.0
        %560 = vmatpush1.msra.mxu0 0.0
        %561 = vmatprep.subr.mxu0 0.0
        %562 = vmatpush1.msra.mxu0 0.0
        %563 = vmatprep.subr.mxu0 0.0
        %564 = vmatpush1.msra.mxu0 0.0
        %565 = vmatprep.subr.mxu0 0.0
        %566 = vmatpush1.msra.mxu0 0.0
        %567 = vmatprep.subr.mxu0 0.0
        %568 = vmatpush1.msra.mxu0 0.0
        %569 = vmatprep.subr.mxu0 0.0
        %570 = vmatpush1.msra.mxu0 0.0
        %571 = vmatprep.subr.mxu0 0.0
        %572 = vmatpush1.msra.mxu0 0.0
        %573 = vmatprep.subr.mxu0 0.0
        %574 = vmatpush1.msra.mxu0 0.0
        %575 = vmatprep.subr.mxu0 0.0
        %576 = vmatpush1.msra.mxu0 0.0
        %577 = vmatprep.subr.mxu0 0.0
        %578 = vmatpush1.msra.mxu0 0.0
        %579 = vmatprep.subr.mxu0 0.0
        %580 = vmatpush1.msra.mxu0 0.0
        %581 = vmatprep.subr.mxu0 0.0
        %582 = vmatpush1.msra.mxu0 0.0
        %583 = vmatprep.subr.mxu0 0.0
        %584 = vmatpush1.msra.mxu0 0.0
        %585 = vmatprep.subr.mxu0 0.0
        %586 = vmatpush1.msra.mxu0 0.0
        %587 = vmatprep.subr.mxu0 0.0
        %588 = vmatpush1.msra.mxu0 0.0
        %589 = vmatprep.subr.mxu0 0.0
        %590 = vmatpush1.msra.mxu0 0.0
        %591 = vmatprep.subr.mxu0 0.0
        %592 = vmatpush1.msra.mxu0 0.0
        %593 = vmatprep.subr.mxu0 0.0
        %594 = vmatpush1.msra.mxu0 0.0
        %595 = vmatprep.subr.mxu0 0.0
        %596 = vmatpush1.msra.mxu0 0.0
        %597 = vmatprep.subr.mxu0 0.0
        %598 = vmatpush1.msra.mxu0 0.0
        %599 = vmatprep.subr.mxu0 0.0
        %600 = vmatpush1.msra.mxu0 0.0
        %601 = vmatprep.subr.mxu0 0.0
        %602 = vmatpush1.msra.mxu0 0.0
        %603 = vmatprep.subr.mxu0 0.0
        %604 = vmatpush1.msra.mxu0 0.0
        %605 = vmatprep.mubr.f32.mxu0 0.0
        %606 = vmatmul.mubr.f32.gmra.mrb[0].mxu0 %v514
        %v607 = vpop.f32.mrb[0].mxu0
        %v608 = vadd.f32 %v510, %v607
        %v609 = vpop.f32.mrb[0].mxu0
        %610 = vmatprep.mubr.f32.mxu0 0.0
        %611 = vmatmul.mubr.f32.gmra.mrb[0].mxu0 %v517
        %v612 = vpop.f32.mrb[0].mxu0
        %v613 = vadd.f32 %v510, %v612
        %v614 = vpop.f32.mrb[0].mxu0
        %615 = vmatprep.mubr.f32.mxu0 0.0
        %616 = vmatmul.mubr.f32.gmra.mrb[0].mxu0 %v520
        %v617 = vpop.f32.mrb[0].mxu0
        %v618 = vadd.f32 %v510, %v617
        %v619 = vpop.f32.mrb[0].mxu0
        %620 = vmatprep.mubr.f32.mxu0 0.0
        %621 = vmatmul.mubr.f32.gmra.mrb[0].mxu0 %v523
        %v622 = vpop.f32.mrb[0].mxu0
        %v623 = vadd.f32 %v510, %v622
        %v624 = vpop.f32.mrb[0].mxu0
        %625 = vmatprep.mubr.f32.mxu0 0.0
        %626 = vmatmul.mubr.f32.gmra.mrb[0].mxu0 %v526
        %v627 = vpop.f32.mrb[0].mxu0
        %v628 = vadd.f32 %v510, %v627
        %v629 = vpop.f32.mrb[0].mxu0
        %630 = vmatprep.mubr.f32.mxu0 0.0
        %631 = vmatmul.mubr.f32.gmra.mrb[0].mxu0 %v529
        %v632 = vpop.f32.mrb[0].mxu0
        %v633 = vadd.f32 %v510, %v632
        %v634 = vpop.f32.mrb[0].mxu0
        %635 = vmatprep.mubr.f32.mxu0 0.0
        %636 = vmatmul.mubr.f32.gmra.mrb[0].mxu0 %v532
        %v637 = vpop.f32.mrb[0].mxu0
        %v638 = vadd.f32 %v510, %v637
        %v639 = vpop.f32.mrb[0].mxu0
        %640 = vmatprep.mubr.f32.mxu0 0.0
        %641 = vmatmul.mubr.f32.gmra.mrb[0].mxu0 %v535
        %v642 = vpop.f32.mrb[0].mxu0
        %v643 = vadd.f32 %v510, %v642
        %v644 = vpop.f32.mrb[0].mxu0
        %645 = vdwg.mxu0
        %v646 = vmax.f32 %v608, 0.0
        %v647 = vmax.f32 %v613, 0.0
        %v648 = vmax.f32 %v618, 0.0
        %v649 = vmax.f32 %v623, 0.0
        %v650 = vmax.f32 %v628, 0.0
        %v651 = vmax.f32 %v633, 0.0
        %v652 = vmax.f32 %v638, 0.0
        %v653 = vmax.f32 %v643, 0.0
        %vm654 = vcmask 261120
        %655 = vst.msk [vmem:[#allocation2] sm:$0xff] %vm654, 0.0
        %s656 = scalar_lea.vmem [#allocation2], 72
        %657 = vst.msk [vmem:[%s656] sm:$0xff] %vm654, 0.0
        %s658 = scalar_lea.vmem [#allocation2], 8
        %659 = vst.msk [vmem:[%s658] sm:$0xff] %vm654, %v646
        %660 = vst.msk [vmem:[%s658 + $0x8] sm:$0xff] %vm654, %v647
        %661 = vst.msk [vmem:[%s658 + $0x10] sm:$0xff] %vm654, %v648
        %662 = vst.msk [vmem:[%s658 + $0x18] sm:$0xff] %vm654, %v649
        %663 = vst.msk [vmem:[%s658 + $0x20] sm:$0xff] %vm654, %v650
        %664 = vst.msk [vmem:[%s658 + $0x28] sm:$0xff] %vm654, %v651
        %665 = vst.msk [vmem:[%s658 + $0x30] sm:$0xff] %vm654, %v652
        %666 = vst.msk [vmem:[%s658 + $0x38] sm:$0xff] %vm654, %v653
        %v667 = vld [vmem:[#allocation2] sm:$0xff]
        %v668 = vld [vmem:[#allocation2 + $0x8] sm:$0xff]
        %v669 = vld [vmem:[#allocation2 + $0x10] sm:$0xff]
        %v670 = vld [vmem:[#allocation2 + $0x18] sm:$0xff]
        %v671 = vld [vmem:[#allocation2 + $0x20] sm:$0xff]
        %v672 = vld [vmem:[#allocation2 + $0x28] sm:$0xff]
        %v673 = vld [vmem:[#allocation2 + $0x30] sm:$0xff]
        %v674 = vld [vmem:[#allocation2 + $0x38] sm:$0xff]
        %v675 = vld [vmem:[#allocation2 + $0x40] sm:$0xff]
        %v676 = vld [vmem:[#allocation2 + $0x48] sm:$0xff]
        %v677 = vlaneseq
        %v678 = vshrl.u32 %v677, 7
        %vm679 = vcmp.gt.s32.totalorder %v678, 0
        %v680 = vsel %vm679, 1, 0
        %v681 = vcvt.s32.f32 %v680
        %vm682 = vcmp.lt.s32.totalorder %v678, 7
        %v683 = vsel %vm682, 1, 0
        %v684 = vcvt.s32.f32 %v683
        %v685 = vrot.slane %v667, 7
        %v686 = vrot.slane %v668, 7
        %v687 = vrot.slane %v669, 7
        %v688 = vrot.slane %v670, 7
        %v689 = vrot.slane %v671, 7
        %v690 = vrot.slane %v672, 7
        %v691 = vrot.slane %v673, 7
        %v692 = vrot.slane %v674, 7
        %v693 = vrot.slane %v675, 7
        %v694 = vrot.slane %v676, 7
        %v695 = vmul.f32 %v685, %v681
        %v696 = vmul.f32 %v686, %v681
        %v697 = vmul.f32 %v687, %v681
        %v698 = vmul.f32 %v688, %v681
        %v699 = vmul.f32 %v689, %v681
        %v700 = vmul.f32 %v690, %v681
        %v701 = vmul.f32 %v691, %v681
        %v702 = vmul.f32 %v692, %v681
        %v703 = vmul.f32 %v693, %v681
        %v704 = vmul.f32 %v694, %v681
        %v705 = vrot.slane %v667, 1
        %v706 = vrot.slane %v668, 1
        %v707 = vrot.slane %v669, 1
        %v708 = vrot.slane %v670, 1
        %v709 = vrot.slane %v671, 1
        %v710 = vrot.slane %v672, 1
        %v711 = vrot.slane %v673, 1
        %v712 = vrot.slane %v674, 1
        %v713 = vrot.slane %v675, 1
        %v714 = vrot.slane %v676, 1
        %v715 = vmul.f32 %v705, %v684
        %v716 = vmul.f32 %v706, %v684
        %v717 = vmul.f32 %v707, %v684
        %v718 = vmul.f32 %v708, %v684
        %v719 = vmul.f32 %v709, %v684
        %v720 = vmul.f32 %v710, %v684
        %v721 = vmul.f32 %v711, %v684
        %v722 = vmul.f32 %v712, %v684
        %v723 = vmul.f32 %v713, %v684
        %v724 = vmul.f32 %v714, %v684
        %v725 = vld [vmem:[%s3] sm:$0xff]
        %v726 = vld [vmem:[%s3 + $0x8] sm:$0x1]
        %v727 = vlaneseq
        %v728 = vshrl.u32 %v727, 7
        %v729 = vsub.s32 0, %v728
        %v730 = vrot.slane %v725, %v729
        %v731 = vmul.f32 %v695, %v730
        %v732 = vmul.f32 %v696, %v730
        %v733 = vmul.f32 %v697, %v730
        %v734 = vmul.f32 %v698, %v730
        %v735 = vmul.f32 %v699, %v730
        %v736 = vmul.f32 %v700, %v730
        %v737 = vmul.f32 %v701, %v730
        %v738 = vmul.f32 %v702, %v730
        %v739 = vadd.f32 %v731, 0.0
        %v740 = vadd.f32 %v732, 0.0
        %v741 = vadd.f32 %v733, 0.0
        %v742 = vadd.f32 %v734, 0.0
        %v743 = vadd.f32 %v735, 0.0
        %v744 = vadd.f32 %v736, 0.0
        %v745 = vadd.f32 %v737, 0.0
        %v746 = vadd.f32 %v738, 0.0
        %v747 = vlaneseq
        %v748 = vshrl.u32 %v747, 7
        %v749 = vsub.s32 1, %v748
        %v750 = vrot.slane %v725, %v749
        %v751 = vmul.f32 %v667, %v750
        %v752 = vmul.f32 %v668, %v750
        %v753 = vmul.f32 %v669, %v750
        %v754 = vmul.f32 %v670, %v750
        %v755 = vmul.f32 %v671, %v750
        %v756 = vmul.f32 %v672, %v750
        %v757 = vmul.f32 %v673, %v750
        %v758 = vmul.f32 %v674, %v750
        %v759 = vadd.f32 %v739, %v751
        %v760 = vadd.f32 %v740, %v752
        %v761 = vadd.f32 %v741, %v753
        %v762 = vadd.f32 %v742, %v754
        %v763 = vadd.f32 %v743, %v755
        %v764 = vadd.f32 %v744, %v756
        %v765 = vadd.f32 %v745, %v757
        %v766 = vadd.f32 %v746, %v758
        %v767 = vlaneseq
        %v768 = vshrl.u32 %v767, 7
        %v769 = vsub.s32 2, %v768
        %v770 = vrot.slane %v725, %v769
        %v771 = vmul.f32 %v715, %v770
        %v772 = vmul.f32 %v716, %v770
        %v773 = vmul.f32 %v717, %v770
        %v774 = vmul.f32 %v718, %v770
        %v775 = vmul.f32 %v719, %v770
        %v776 = vmul.f32 %v720, %v770
        %v777 = vmul.f32 %v721, %v770
        %v778 = vmul.f32 %v722, %v770
        %v779 = vadd.f32 %v759, %v771
        %v780 = vadd.f32 %v760, %v772
        %v781 = vadd.f32 %v761, %v773
        %v782 = vadd.f32 %v762, %v774
        %v783 = vadd.f32 %v763, %v775
        %v784 = vadd.f32 %v764, %v776
        %v785 = vadd.f32 %v765, %v777
        %v786 = vadd.f32 %v766, %v778
        %v787 = vlaneseq
        %v788 = vshrl.u32 %v787, 7
        %v789 = vsub.s32 3, %v788
        %v790 = vrot.slane %v725, %v789
        %v791 = vmul.f32 %v696, %v790
        %v792 = vmul.f32 %v697, %v790
        %v793 = vmul.f32 %v698, %v790
        %v794 = vmul.f32 %v699, %v790
        %v795 = vmul.f32 %v700, %v790
        %v796 = vmul.f32 %v701, %v790
        %v797 = vmul.f32 %v702, %v790
        %v798 = vmul.f32 %v703, %v790
        %v799 = vadd.f32 %v779, %v791
        %v800 = vadd.f32 %v780, %v792
        %v801 = vadd.f32 %v781, %v793
        %v802 = vadd.f32 %v782, %v794
        %v803 = vadd.f32 %v783, %v795
        %v804 = vadd.f32 %v784, %v796
        %v805 = vadd.f32 %v785, %v797
        %v806 = vadd.f32 %v786, %v798
        %v807 = vlaneseq
        %v808 = vshrl.u32 %v807, 7
        %v809 = vsub.s32 4, %v808
        %v810 = vrot.slane %v725, %v809
        %v811 = vmul.f32 %v668, %v810
        %v812 = vmul.f32 %v669, %v810
        %v813 = vmul.f32 %v670, %v810
        %v814 = vmul.f32 %v671, %v810
        %v815 = vmul.f32 %v672, %v810
        %v816 = vmul.f32 %v673, %v810
        %v817 = vmul.f32 %v674, %v810
        %v818 = vmul.f32 %v675, %v810
        %v819 = vadd.f32 %v799, %v811
        %v820 = vadd.f32 %v800, %v812
        %v821 = vadd.f32 %v801, %v813
        %v822 = vadd.f32 %v802, %v814
        %v823 = vadd.f32 %v803, %v815
        %v824 = vadd.f32 %v804, %v816
        %v825 = vadd.f32 %v805, %v817
        %v826 = vadd.f32 %v806, %v818
        %v827 = vlaneseq
        %v828 = vshrl.u32 %v827, 7
        %v829 = vsub.s32 5, %v828
        %v830 = vrot.slane %v725, %v829
        %v831 = vmul.f32 %v716, %v830
        %v832 = vmul.f32 %v717, %v830
        %v833 = vmul.f32 %v718, %v830
        %v834 = vmul.f32 %v719, %v830
        %v835 = vmul.f32 %v720, %v830
        %v836 = vmul.f32 %v721, %v830
        %v837 = vmul.f32 %v722, %v830
        %v838 = vmul.f32 %v723, %v830
        %v839 = vadd.f32 %v819, %v831
        %v840 = vadd.f32 %v820, %v832
        %v841 = vadd.f32 %v821, %v833
        %v842 = vadd.f32 %v822, %v834
        %v843 = vadd.f32 %v823, %v835
        %v844 = vadd.f32 %v824, %v836
        %v845 = vadd.f32 %v825, %v837
        %v846 = vadd.f32 %v826, %v838
        %v847 = vlaneseq
        %v848 = vshrl.u32 %v847, 7
        %v849 = vsub.s32 6, %v848
        %v850 = vrot.slane %v725, %v849
        %v851 = vmul.f32 %v697, %v850
        %v852 = vmul.f32 %v698, %v850
        %v853 = vmul.f32 %v699, %v850
        %v854 = vmul.f32 %v700, %v850
        %v855 = vmul.f32 %v701, %v850
        %v856 = vmul.f32 %v702, %v850
        %v857 = vmul.f32 %v703, %v850
        %v858 = vmul.f32 %v704, %v850
        %v859 = vadd.f32 %v839, %v851
        %v860 = vadd.f32 %v840, %v852
        %v861 = vadd.f32 %v841, %v853
        %v862 = vadd.f32 %v842, %v854
        %v863 = vadd.f32 %v843, %v855
        %v864 = vadd.f32 %v844, %v856
        %v865 = vadd.f32 %v845, %v857
        %v866 = vadd.f32 %v846, %v858
        %v867 = vlaneseq
        %v868 = vshrl.u32 %v867, 7
        %v869 = vsub.s32 7, %v868
        %v870 = vrot.slane %v725, %v869
        %v871 = vmul.f32 %v669, %v870
        %v872 = vmul.f32 %v670, %v870
        %v873 = vmul.f32 %v671, %v870
        %v874 = vmul.f32 %v672, %v870
        %v875 = vmul.f32 %v673, %v870
        %v876 = vmul.f32 %v674, %v870
        %v877 = vmul.f32 %v675, %v870
        %v878 = vmul.f32 %v676, %v870
        %v879 = vadd.f32 %v859, %v871
        %v880 = vadd.f32 %v860, %v872
        %v881 = vadd.f32 %v861, %v873
        %v882 = vadd.f32 %v862, %v874
        %v883 = vadd.f32 %v863, %v875
        %v884 = vadd.f32 %v864, %v876
        %v885 = vadd.f32 %v865, %v877
        %v886 = vadd.f32 %v866, %v878
        %v887 = vlaneseq
        %v888 = vshrl.u32 %v887, 7
        %v889 = vsub.s32 0, %v888
        %v890 = vrot.slane %v726, %v889
        %v891 = vmul.f32 %v717, %v890
        %v892 = vmul.f32 %v718, %v890
        %v893 = vmul.f32 %v719, %v890
        %v894 = vmul.f32 %v720, %v890
        %v895 = vmul.f32 %v721, %v890
        %v896 = vmul.f32 %v722, %v890
        %v897 = vmul.f32 %v723, %v890
        %v898 = vmul.f32 %v724, %v890
        %v899 = vadd.f32 %v879, %v891
        %v900 = vadd.f32 %v880, %v892
        %v901 = vadd.f32 %v881, %v893
        %v902 = vadd.f32 %v882, %v894
        %v903 = vadd.f32 %v883, %v895
        %v904 = vadd.f32 %v884, %v896
        %v905 = vadd.f32 %v885, %v897
        %v906 = vadd.f32 %v886, %v898
        %v907 = vld [vmem:[%s4] sm:$0x1]
        %v909 = vlaneseq
        %v910 = vshrl.u32 %v909, 7
        %v911 = vsub.s32 0, %v910
        %v912 = vrot.slane %v907, %v911
        %v914 = vadd.f32 %v899, %v912
        %v915 = vadd.f32 %v900, %v912
        %v916 = vadd.f32 %v901, %v912
        %v917 = vadd.f32 %v902, %v912
        %v918 = vadd.f32 %v903, %v912
        %v919 = vadd.f32 %v904, %v912
        %v920 = vadd.f32 %v905, %v912
        %v921 = vadd.f32 %v906, %v912
        %v922 = vmax.f32 %v914, 0.0
        %v923 = vmax.f32 %v915, 0.0
        %v924 = vmax.f32 %v916, 0.0
        %v925 = vmax.f32 %v917, 0.0
        %v926 = vmax.f32 %v918, 0.0
        %v927 = vmax.f32 %v919, 0.0
        %v928 = vmax.f32 %v920, 0.0
        %v929 = vmax.f32 %v921, 0.0
        %v930 = vld [vmem:[%s5] sm:$0xff]
        %v931 = vld [vmem:[%s5 + $0x8] sm:$0xff]
        %v932 = vld [vmem:[%s5 + $0x10] sm:$0xff]
        %v933 = vld [vmem:[%s5 + $0x18] sm:$0xff]
        %v934 = vld [vmem:[%s6] sm:$0x1]
        %v936 = vlaneseq
        %v937 = vshrl.u32 %v936, 7
        %v938 = vsub.s32 0, %v937
        %v939 = vrot.slane %v934, %v938
        %v942 = vsel %vm654, %v922, 0
        %v945 = vsel %vm654, %v923, 0
        %v948 = vsel %vm654, %v924, 0
        %v951 = vsel %vm654, %v925, 0
        %v954 = vsel %vm654, %v926, 0
        %v957 = vsel %vm654, %v927, 0
        %v960 = vsel %vm654, %v928, 0
        %v963 = vsel %vm654, %v929, 0
        %965 = vmatprep.subr.mxu0 0.0
        %966 = vmatpush1.msra.mxu0 %v930
        %967 = vmatprep.subr.mxu0 0.0
        %968 = vmatpush1.msra.mxu0 %v931
        %969 = vmatprep.subr.mxu0 0.0
        %970 = vmatpush1.msra.mxu0 %v932
        %971 = vmatprep.subr.mxu0 0.0
        %972 = vmatpush1.msra.mxu0 %v933
        %973 = vmatprep.subr.mxu0 0.0
        %974 = vmatpush1.msra.mxu0 0.0
        %975 = vmatprep.subr.mxu0 0.0
        %976 = vmatpush1.msra.mxu0 0.0
        %977 = vmatprep.subr.mxu0 0.0
        %978 = vmatpush1.msra.mxu0 0.0
        %979 = vmatprep.subr.mxu0 0.0
        %980 = vmatpush1.msra.mxu0 0.0
        %981 = vmatprep.subr.mxu0 0.0
        %982 = vmatpush1.msra.mxu0 0.0
        %983 = vmatprep.subr.mxu0 0.0
        %984 = vmatpush1.msra.mxu0 0.0
        %985 = vmatprep.subr.mxu0 0.0
        %986 = vmatpush1.msra.mxu0 0.0
        %987 = vmatprep.subr.mxu0 0.0
        %988 = vmatpush1.msra.mxu0 0.0
        %989 = vmatprep.subr.mxu0 0.0
        %990 = vmatpush1.msra.mxu0 0.0
        %991 = vmatprep.subr.mxu0 0.0
        %992 = vmatpush1.msra.mxu0 0.0
        %993 = vmatprep.subr.mxu0 0.0
        %994 = vmatpush1.msra.mxu0 0.0
        %995 = vmatprep.subr.mxu0 0.0
        %996 = vmatpush1.msra.mxu0 0.0
        %997 = vmatprep.subr.mxu0 0.0
        %998 = vmatpush1.msra.mxu0 0.0
        %999 = vmatprep.subr.mxu0 0.0
        %1000 = vmatpush1.msra.mxu0 0.0
        %1001 = vmatprep.subr.mxu0 0.0
        %1002 = vmatpush1.msra.mxu0 0.0
        %1003 = vmatprep.subr.mxu0 0.0
        %1004 = vmatpush1.msra.mxu0 0.0
        %1005 = vmatprep.subr.mxu0 0.0
        %1006 = vmatpush1.msra.mxu0 0.0
        %1007 = vmatprep.subr.mxu0 0.0
        %1008 = vmatpush1.msra.mxu0 0.0
        %1009 = vmatprep.subr.mxu0 0.0
        %1010 = vmatpush1.msra.mxu0 0.0
        %1011 = vmatprep.subr.mxu0 0.0
        %1012 = vmatpush1.msra.mxu0 0.0
        %1013 = vmatprep.subr.mxu0 0.0
        %1014 = vmatpush1.msra.mxu0 0.0
        %1015 = vmatprep.subr.mxu0 0.0
        %1016 = vmatpush1.msra.mxu0 0.0
        %1017 = vmatprep.subr.mxu0 0.0
        %1018 = vmatpush1.msra.mxu0 0.0
        %1019 = vmatprep.subr.mxu0 0.0
        %1020 = vmatpush1.msra.mxu0 0.0
        %1021 = vmatprep.subr.mxu0 0.0
        %1022 = vmatpush1.msra.mxu0 0.0
        %1023 = vmatprep.subr.mxu0 0.0
        %1024 = vmatpush1.msra.mxu0 0.0
        %1025 = vmatprep.subr.mxu0 0.0
        %1026 = vmatpush1.msra.mxu0 0.0
        %1027 = vmatprep.subr.mxu0 0.0
        %1028 = vmatpush1.msra.mxu0 0.0
        %1029 = vmatprep.mubr.f32.mxu0 0.0
        %1030 = vmatmul.mubr.f32.gmra.mrb[0].mxu0 %v942
        %v1031 = vpop.f32.mrb[0].mxu0
        %v1032 = vadd.f32 %v939, %v1031
        %v1033 = vpop.f32.mrb[0].mxu0
        %1034 = vmatprep.mubr.f32.mxu0 0.0
        %1035 = vmatmul.mubr.f32.gmra.mrb[0].mxu0 %v945
        %v1036 = vpop.f32.mrb[0].mxu0
        %v1037 = vadd.f32 %v939, %v1036
        %v1038 = vpop.f32.mrb[0].mxu0
        %1039 = vmatprep.mubr.f32.mxu0 0.0
        %1040 = vmatmul.mubr.f32.gmra.mrb[0].mxu0 %v948
        %v1041 = vpop.f32.mrb[0].mxu0
        %v1042 = vadd.f32 %v939, %v1041
        %v1043 = vpop.f32.mrb[0].mxu0
        %1044 = vmatprep.mubr.f32.mxu0 0.0
        %1045 = vmatmul.mubr.f32.gmra.mrb[0].mxu0 %v951
        %v1046 = vpop.f32.mrb[0].mxu0
        %v1047 = vadd.f32 %v939, %v1046
        %v1048 = vpop.f32.mrb[0].mxu0
        %1049 = vmatprep.mubr.f32.mxu0 0.0
        %1050 = vmatmul.mubr.f32.gmra.mrb[0].mxu0 %v954
        %v1051 = vpop.f32.mrb[0].mxu0
        %v1052 = vadd.f32 %v939, %v1051
        %v1053 = vpop.f32.mrb[0].mxu0
        %1054 = vmatprep.mubr.f32.mxu0 0.0
        %1055 = vmatmul.mubr.f32.gmra.mrb[0].mxu0 %v957
        %v1056 = vpop.f32.mrb[0].mxu0
        %v1057 = vadd.f32 %v939, %v1056
        %v1058 = vpop.f32.mrb[0].mxu0
        %1059 = vmatprep.mubr.f32.mxu0 0.0
        %1060 = vmatmul.mubr.f32.gmra.mrb[0].mxu0 %v960
        %v1061 = vpop.f32.mrb[0].mxu0
        %v1062 = vadd.f32 %v939, %v1061
        %v1063 = vpop.f32.mrb[0].mxu0
        %1064 = vmatprep.mubr.f32.mxu0 0.0
        %1065 = vmatmul.mubr.f32.gmra.mrb[0].mxu0 %v963
        %v1066 = vpop.f32.mrb[0].mxu0
        %v1067 = vadd.f32 %v939, %v1066
        %v1068 = vpop.f32.mrb[0].mxu0
        %1069 = vdwg.mxu0
        %v1070 = vmax.f32 %v1032, 0.0
        %v1071 = vmax.f32 %v1037, 0.0
        %v1072 = vmax.f32 %v1042, 0.0
        %v1073 = vmax.f32 %v1047, 0.0
        %v1074 = vmax.f32 %v1052, 0.0
        %v1075 = vmax.f32 %v1057, 0.0
        %v1076 = vmax.f32 %v1062, 0.0
        %v1077 = vmax.f32 %v1067, 0.0
        %vm1078 = vcmask 523264
        %1079 = vst.msk [vmem:[#allocation3] sm:$0xff] %vm1078, 0.0
        %s1080 = scalar_lea.vmem [#allocation3], 72
        %1081 = vst.msk [vmem:[%s1080] sm:$0xff] %vm1078, 0.0
        %s1082 = scalar_lea.vmem [#allocation3], 8
        %1083 = vst.msk [vmem:[%s1082] sm:$0xff] %vm1078, %v1070
        %1084 = vst.msk [vmem:[%s1082 + $0x8] sm:$0xff] %vm1078, %v1071
        %1085 = vst.msk [vmem:[%s1082 + $0x10] sm:$0xff] %vm1078, %v1072
        %1086 = vst.msk [vmem:[%s1082 + $0x18] sm:$0xff] %vm1078, %v1073
        %1087 = vst.msk [vmem:[%s1082 + $0x20] sm:$0xff] %vm1078, %v1074
        %1088 = vst.msk [vmem:[%s1082 + $0x28] sm:$0xff] %vm1078, %v1075
        %1089 = vst.msk [vmem:[%s1082 + $0x30] sm:$0xff] %vm1078, %v1076
        %1090 = vst.msk [vmem:[%s1082 + $0x38] sm:$0xff] %vm1078, %v1077
        %v1091 = vld [vmem:[#allocation3] sm:$0xff]
        %v1092 = vld [vmem:[#allocation3 + $0x8] sm:$0xff]
        %v1093 = vld [vmem:[#allocation3 + $0x10] sm:$0xff]
        %v1094 = vld [vmem:[#allocation3 + $0x18] sm:$0xff]
        %v1095 = vld [vmem:[#allocation3 + $0x20] sm:$0xff]
        %v1096 = vld [vmem:[#allocation3 + $0x28] sm:$0xff]
        %v1097 = vld [vmem:[#allocation3 + $0x30] sm:$0xff]
        %v1098 = vld [vmem:[#allocation3 + $0x38] sm:$0xff]
        %v1099 = vld [vmem:[#allocation3 + $0x40] sm:$0xff]
        %v1100 = vld [vmem:[#allocation3 + $0x48] sm:$0xff]
        %v1101 = vrot.slane %v1091, 7
        %v1102 = vrot.slane %v1092, 7
        %v1103 = vrot.slane %v1093, 7
        %v1104 = vrot.slane %v1094, 7
        %v1105 = vrot.slane %v1095, 7
        %v1106 = vrot.slane %v1096, 7
        %v1107 = vrot.slane %v1097, 7
        %v1108 = vrot.slane %v1098, 7
        %v1109 = vrot.slane %v1099, 7
        %v1110 = vrot.slane %v1100, 7
        %v1111 = vmul.f32 %v1101, %v681
        %v1112 = vmul.f32 %v1102, %v681
        %v1113 = vmul.f32 %v1103, %v681
        %v1114 = vmul.f32 %v1104, %v681
        %v1115 = vmul.f32 %v1105, %v681
        %v1116 = vmul.f32 %v1106, %v681
        %v1117 = vmul.f32 %v1107, %v681
        %v1118 = vmul.f32 %v1108, %v681
        %v1119 = vmul.f32 %v1109, %v681
        %v1120 = vmul.f32 %v1110, %v681
        %v1121 = vrot.slane %v1091, 1
        %v1122 = vrot.slane %v1092, 1
        %v1123 = vrot.slane %v1093, 1
        %v1124 = vrot.slane %v1094, 1
        %v1125 = vrot.slane %v1095, 1
        %v1126 = vrot.slane %v1096, 1
        %v1127 = vrot.slane %v1097, 1
        %v1128 = vrot.slane %v1098, 1
        %v1129 = vrot.slane %v1099, 1
        %v1130 = vrot.slane %v1100, 1
        %v1131 = vmul.f32 %v1121, %v684
        %v1132 = vmul.f32 %v1122, %v684
        %v1133 = vmul.f32 %v1123, %v684
        %v1134 = vmul.f32 %v1124, %v684
        %v1135 = vmul.f32 %v1125, %v684
        %v1136 = vmul.f32 %v1126, %v684
        %v1137 = vmul.f32 %v1127, %v684
        %v1138 = vmul.f32 %v1128, %v684
        %v1139 = vmul.f32 %v1129, %v684
        %v1140 = vmul.f32 %v1130, %v684
        %v1141 = vld [vmem:[%s7] sm:$0xff]
        %v1142 = vld [vmem:[%s7 + $0x8] sm:$0x1]
        %v1143 = vlaneseq
        %v1144 = vshrl.u32 %v1143, 7
        %v1145 = vsub.s32 0, %v1144
        %v1146 = vrot.slane %v1141, %v1145
        %v1147 = vmul.f32 %v1111, %v1146
        %v1148 = vmul.f32 %v1112, %v1146
        %v1149 = vmul.f32 %v1113, %v1146
        %v1150 = vmul.f32 %v1114, %v1146
        %v1151 = vmul.f32 %v1115, %v1146
        %v1152 = vmul.f32 %v1116, %v1146
        %v1153 = vmul.f32 %v1117, %v1146
        %v1154 = vmul.f32 %v1118, %v1146
        %v1155 = vadd.f32 %v1147, 0.0
        %v1156 = vadd.f32 %v1148, 0.0
        %v1157 = vadd.f32 %v1149, 0.0
        %v1158 = vadd.f32 %v1150, 0.0
        %v1159 = vadd.f32 %v1151, 0.0
        %v1160 = vadd.f32 %v1152, 0.0
        %v1161 = vadd.f32 %v1153, 0.0
        %v1162 = vadd.f32 %v1154, 0.0
        %v1163 = vlaneseq
        %v1164 = vshrl.u32 %v1163, 7
        %v1165 = vsub.s32 1, %v1164
        %v1166 = vrot.slane %v1141, %v1165
        %v1167 = vmul.f32 %v1091, %v1166
        %v1168 = vmul.f32 %v1092, %v1166
        %v1169 = vmul.f32 %v1093, %v1166
        %v1170 = vmul.f32 %v1094, %v1166
        %v1171 = vmul.f32 %v1095, %v1166
        %v1172 = vmul.f32 %v1096, %v1166
        %v1173 = vmul.f32 %v1097, %v1166
        %v1174 = vmul.f32 %v1098, %v1166
        %v1175 = vadd.f32 %v1155, %v1167
        %v1176 = vadd.f32 %v1156, %v1168
        %v1177 = vadd.f32 %v1157, %v1169
        %v1178 = vadd.f32 %v1158, %v1170
        %v1179 = vadd.f32 %v1159, %v1171
        %v1180 = vadd.f32 %v1160, %v1172
        %v1181 = vadd.f32 %v1161, %v1173
        %v1182 = vadd.f32 %v1162, %v1174
        %v1183 = vlaneseq
        %v1184 = vshrl.u32 %v1183, 7
        %v1185 = vsub.s32 2, %v1184
        %v1186 = vrot.slane %v1141, %v1185
        %v1187 = vmul.f32 %v1131, %v1186
        %v1188 = vmul.f32 %v1132, %v1186
        %v1189 = vmul.f32 %v1133, %v1186
        %v1190 = vmul.f32 %v1134, %v1186
        %v1191 = vmul.f32 %v1135, %v1186
        %v1192 = vmul.f32 %v1136, %v1186
        %v1193 = vmul.f32 %v1137, %v1186
        %v1194 = vmul.f32 %v1138, %v1186
        %v1195 = vadd.f32 %v1175, %v1187
        %v1196 = vadd.f32 %v1176, %v1188
        %v1197 = vadd.f32 %v1177, %v1189
        %v1198 = vadd.f32 %v1178, %v1190
        %v1199 = vadd.f32 %v1179, %v1191
        %v1200 = vadd.f32 %v1180, %v1192
        %v1201 = vadd.f32 %v1181, %v1193
        %v1202 = vadd.f32 %v1182, %v1194
        %v1203 = vlaneseq
        %v1204 = vshrl.u32 %v1203, 7
        %v1205 = vsub.s32 3, %v1204
        %v1206 = vrot.slane %v1141, %v1205
        %v1207 = vmul.f32 %v1112, %v1206
        %v1208 = vmul.f32 %v1113, %v1206
        %v1209 = vmul.f32 %v1114, %v1206
        %v1210 = vmul.f32 %v1115, %v1206
        %v1211 = vmul.f32 %v1116, %v1206
        %v1212 = vmul.f32 %v1117, %v1206
        %v1213 = vmul.f32 %v1118, %v1206
        %v1214 = vmul.f32 %v1119, %v1206
        %v1215 = vadd.f32 %v1195, %v1207
        %v1216 = vadd.f32 %v1196, %v1208
        %v1217 = vadd.f32 %v1197, %v1209
        %v1218 = vadd.f32 %v1198, %v1210
        %v1219 = vadd.f32 %v1199, %v1211
        %v1220 = vadd.f32 %v1200, %v1212
        %v1221 = vadd.f32 %v1201, %v1213
        %v1222 = vadd.f32 %v1202, %v1214
        %v1223 = vlaneseq
        %v1224 = vshrl.u32 %v1223, 7
        %v1225 = vsub.s32 4, %v1224
        %v1226 = vrot.slane %v1141, %v1225
        %v1227 = vmul.f32 %v1092, %v1226
        %v1228 = vmul.f32 %v1093, %v1226
        %v1229 = vmul.f32 %v1094, %v1226
        %v1230 = vmul.f32 %v1095, %v1226
        %v1231 = vmul.f32 %v1096, %v1226
        %v1232 = vmul.f32 %v1097, %v1226
        %v1233 = vmul.f32 %v1098, %v1226
        %v1234 = vmul.f32 %v1099, %v1226
        %v1235 = vadd.f32 %v1215, %v1227
        %v1236 = vadd.f32 %v1216, %v1228
        %v1237 = vadd.f32 %v1217, %v1229
        %v1238 = vadd.f32 %v1218, %v1230
        %v1239 = vadd.f32 %v1219, %v1231
        %v1240 = vadd.f32 %v1220, %v1232
        %v1241 = vadd.f32 %v1221, %v1233
        %v1242 = vadd.f32 %v1222, %v1234
        %v1243 = vlaneseq
        %v1244 = vshrl.u32 %v1243, 7
        %v1245 = vsub.s32 5, %v1244
        %v1246 = vrot.slane %v1141, %v1245
        %v1247 = vmul.f32 %v1132, %v1246
        %v1248 = vmul.f32 %v1133, %v1246
        %v1249 = vmul.f32 %v1134, %v1246
        %v1250 = vmul.f32 %v1135, %v1246
        %v1251 = vmul.f32 %v1136, %v1246
        %v1252 = vmul.f32 %v1137, %v1246
        %v1253 = vmul.f32 %v1138, %v1246
        %v1254 = vmul.f32 %v1139, %v1246
        %v1255 = vadd.f32 %v1235, %v1247
        %v1256 = vadd.f32 %v1236, %v1248
        %v1257 = vadd.f32 %v1237, %v1249
        %v1258 = vadd.f32 %v1238, %v1250
        %v1259 = vadd.f32 %v1239, %v1251
        %v1260 = vadd.f32 %v1240, %v1252
        %v1261 = vadd.f32 %v1241, %v1253
        %v1262 = vadd.f32 %v1242, %v1254
        %v1263 = vlaneseq
        %v1264 = vshrl.u32 %v1263, 7
        %v1265 = vsub.s32 6, %v1264
        %v1266 = vrot.slane %v1141, %v1265
        %v1267 = vmul.f32 %v1113, %v1266
        %v1268 = vmul.f32 %v1114, %v1266
        %v1269 = vmul.f32 %v1115, %v1266
        %v1270 = vmul.f32 %v1116, %v1266
        %v1271 = vmul.f32 %v1117, %v1266
        %v1272 = vmul.f32 %v1118, %v1266
        %v1273 = vmul.f32 %v1119, %v1266
        %v1274 = vmul.f32 %v1120, %v1266
        %v1275 = vadd.f32 %v1255, %v1267
        %v1276 = vadd.f32 %v1256, %v1268
        %v1277 = vadd.f32 %v1257, %v1269
        %v1278 = vadd.f32 %v1258, %v1270
        %v1279 = vadd.f32 %v1259, %v1271
        %v1280 = vadd.f32 %v1260, %v1272
        %v1281 = vadd.f32 %v1261, %v1273
        %v1282 = vadd.f32 %v1262, %v1274
        %v1283 = vlaneseq
        %v1284 = vshrl.u32 %v1283, 7
        %v1285 = vsub.s32 7, %v1284
        %v1286 = vrot.slane %v1141, %v1285
        %v1287 = vmul.f32 %v1093, %v1286
        %v1288 = vmul.f32 %v1094, %v1286
        %v1289 = vmul.f32 %v1095, %v1286
        %v1290 = vmul.f32 %v1096, %v1286
        %v1291 = vmul.f32 %v1097, %v1286
        %v1292 = vmul.f32 %v1098, %v1286
        %v1293 = vmul.f32 %v1099, %v1286
        %v1294 = vmul.f32 %v1100, %v1286
        %v1295 = vadd.f32 %v1275, %v1287
        %v1296 = vadd.f32 %v1276, %v1288
        %v1297 = vadd.f32 %v1277, %v1289
        %v1298 = vadd.f32 %v1278, %v1290
        %v1299 = vadd.f32 %v1279, %v1291
        %v1300 = vadd.f32 %v1280, %v1292
        %v1301 = vadd.f32 %v1281, %v1293
        %v1302 = vadd.f32 %v1282, %v1294
        %v1303 = vlaneseq
        %v1304 = vshrl.u32 %v1303, 7
        %v1305 = vsub.s32 0, %v1304
        %v1306 = vrot.slane %v1142, %v1305
        %v1307 = vmul.f32 %v1133, %v1306
        %v1308 = vmul.f32 %v1134, %v1306
        %v1309 = vmul.f32 %v1135, %v1306
        %v1310 = vmul.f32 %v1136, %v1306
        %v1311 = vmul.f32 %v1137, %v1306
        %v1312 = vmul.f32 %v1138, %v1306
        %v1313 = vmul.f32 %v1139, %v1306
        %v1314 = vmul.f32 %v1140, %v1306
        %v1315 = vadd.f32 %v1295, %v1307
        %v1316 = vadd.f32 %v1296, %v1308
        %v1317 = vadd.f32 %v1297, %v1309
        %v1318 = vadd.f32 %v1298, %v1310
        %v1319 = vadd.f32 %v1299, %v1311
        %v1320 = vadd.f32 %v1300, %v1312
        %v1321 = vadd.f32 %v1301, %v1313
        %v1322 = vadd.f32 %v1302, %v1314
        %v1323 = vld [vmem:[%s8] sm:$0x1]
        %v1325 = vlaneseq
        %v1326 = vshrl.u32 %v1325, 7
        %v1327 = vsub.s32 0, %v1326
        %v1328 = vrot.slane %v1323, %v1327
        %v1330 = vadd.f32 %v1315, %v1328
        %v1331 = vadd.f32 %v1316, %v1328
        %v1332 = vadd.f32 %v1317, %v1328
        %v1333 = vadd.f32 %v1318, %v1328
        %v1334 = vadd.f32 %v1319, %v1328
        %v1335 = vadd.f32 %v1320, %v1328
        %v1336 = vadd.f32 %v1321, %v1328
        %v1337 = vadd.f32 %v1322, %v1328
        %v1338 = vmax.f32 %v1330, 0.0
        %v1339 = vmax.f32 %v1331, 0.0
        %v1340 = vmax.f32 %v1332, 0.0
        %v1341 = vmax.f32 %v1333, 0.0
        %v1342 = vmax.f32 %v1334, 0.0
        %v1343 = vmax.f32 %v1335, 0.0
        %v1344 = vmax.f32 %v1336, 0.0
        %v1345 = vmax.f32 %v1337, 0.0
        %v1346 = vld [vmem:[%s9] sm:$0xff]
        %v1347 = vld [vmem:[%s9 + $0x8] sm:$0xff]
        %v1348 = vld [vmem:[%s9 + $0x10] sm:$0xff]
        %v1349 = vld [vmem:[%s9 + $0x18] sm:$0xff]
        %v1350 = vld [vmem:[%s9 + $0x20] sm:$0xff]
        %v1351 = vld [vmem:[%s9 + $0x28] sm:$0xff]
        %v1352 = vld [vmem:[%s9 + $0x30] sm:$0xff]
        %v1353 = vld [vmem:[%s9 + $0x38] sm:$0xff]
        %v1354 = vld [vmem:[%s10] sm:$0x1]
        %v1356 = vlaneseq
        %v1357 = vshrl.u32 %v1356, 7
        %v1358 = vsub.s32 0, %v1357
        %v1359 = vrot.slane %v1354, %v1358
        %v1362 = vsel %vm1078, %v1338, 0
        %v1365 = vsel %vm1078, %v1339, 0
        %v1368 = vsel %vm1078, %v1340, 0
        %v1371 = vsel %vm1078, %v1341, 0
        %v1374 = vsel %vm1078, %v1342, 0
        %v1377 = vsel %vm1078, %v1343, 0
        %v1380 = vsel %vm1078, %v1344, 0
        %v1383 = vsel %vm1078, %v1345, 0
        %1385 = vmatprep.subr.mxu0 0.0
        %1386 = vmatpush1.msra.mxu0 %v1346
        %1387 = vmatprep.subr.mxu0 0.0
        %1388 = vmatpush1.msra.mxu0 %v1347
        %1389 = vmatprep.subr.mxu0 0.0
        %1390 = vmatpush1.msra.mxu0 %v1348
        %1391 = vmatprep.subr.mxu0 0.0
        %1392 = vmatpush1.msra.mxu0 %v1349
        %1393 = vmatprep.subr.mxu0 0.0
        %1394 = vmatpush1.msra.mxu0 %v1350
        %1395 = vmatprep.subr.mxu0 0.0
        %1396 = vmatpush1.msra.mxu0 %v1351
        %1397 = vmatprep.subr.mxu0 0.0
        %1398 = vmatpush1.msra.mxu0 %v1352
        %1399 = vmatprep.subr.mxu0 0.0
        %1400 = vmatpush1.msra.mxu0 %v1353
        %1401 = vmatprep.subr.mxu0 0.0
        %1402 = vmatpush1.msra.mxu0 0.0
        %1403 = vmatprep.subr.mxu0 0.0
        %1404 = vmatpush1.msra.mxu0 0.0
        %1405 = vmatprep.subr.mxu0 0.0
        %1406 = vmatpush1.msra.mxu0 0.0
        %1407 = vmatprep.subr.mxu0 0.0
        %1408 = vmatpush1.msra.mxu0 0.0
        %1409 = vmatprep.subr.mxu0 0.0
        %1410 = vmatpush1.msra.mxu0 0.0
        %1411 = vmatprep.subr.mxu0 0.0
        %1412 = vmatpush1.msra.mxu0 0.0
        %1413 = vmatprep.subr.mxu0 0.0
        %1414 = vmatpush1.msra.mxu0 0.0
        %1415 = vmatprep.subr.mxu0 0.0
        %1416 = vmatpush1.msra.mxu0 0.0
        %1417 = vmatprep.subr.mxu0 0.0
        %1418 = vmatpush1.msra.mxu0 0.0
        %1419 = vmatprep.subr.mxu0 0.0
        %1420 = vmatpush1.msra.mxu0 0.0
        %1421 = vmatprep.subr.mxu0 0.0
        %1422 = vmatpush1.msra.mxu0 0.0
        %1423 = vmatprep.subr.mxu0 0.0
        %1424 = vmatpush1.msra.mxu0 0.0
        %1425 = vmatprep.subr.mxu0 0.0
        %1426 = vmatpush1.msra.mxu0 0.0
        %1427 = vmatprep.subr.mxu0 0.0
        %1428 = vmatpush1.msra.mxu0 0.0
        %1429 = vmatprep.subr.mxu0 0.0
        %1430 = vmatpush1.msra.mxu0 0.0
        %1431 = vmatprep.subr.mxu0 0.0
        %1432 = vmatpush1.msra.mxu0 0.0
        %1433 = vmatprep.subr.mxu0 0.0
        %1434 = vmatpush1.msra.mxu0 0.0
        %1435 = vmatprep.subr.mxu0 0.0
        %1436 = vmatpush1.msra.mxu0 0.0
        %1437 = vmatprep.subr.mxu0 0.0
        %1438 = vmatpush1.msra.mxu0 0.0
        %1439 = vmatprep.subr.mxu0 0.0
        %1440 = vmatpush1.msra.mxu0 0.0
        %1441 = vmatprep.subr.mxu0 0.0
        %1442 = vmatpush1.msra.mxu0 0.0
        %1443 = vmatprep.subr.mxu0 0.0
        %1444 = vmatpush1.msra.mxu0 0.0
        %1445 = vmatprep.subr.mxu0 0.0
        %1446 = vmatpush1.msra.mxu0 0.0
        %1447 = vmatprep.subr.mxu0 0.0
        %1448 = vmatpush1.msra.mxu0 0.0
        %1449 = vmatprep.mubr.f32.mxu0 0.0
        %1450 = vmatmul.mubr.f32.gmra.mrb[0].mxu0 %v1362
        %v1451 = vpop.f32.mrb[0].mxu0
        %v1452 = vadd.f32 %v1359, %v1451
        %v1453 = vpop.f32.mrb[0].mxu0
        %1454 = vmatprep.mubr.f32.mxu0 0.0
        %1455 = vmatmul.mubr.f32.gmra.mrb[0].mxu0 %v1365
        %v1456 = vpop.f32.mrb[0].mxu0
        %v1457 = vadd.f32 %v1359, %v1456
        %v1458 = vpop.f32.mrb[0].mxu0
        %1459 = vmatprep.mubr.f32.mxu0 0.0
        %1460 = vmatmul.mubr.f32.gmra.mrb[0].mxu0 %v1368
        %v1461 = vpop.f32.mrb[0].mxu0
        %v1462 = vadd.f32 %v1359, %v1461
        %v1463 = vpop.f32.mrb[0].mxu0
        %1464 = vmatprep.mubr.f32.mxu0 0.0
        %1465 = vmatmul.mubr.f32.gmra.mrb[0].mxu0 %v1371
        %v1466 = vpop.f32.mrb[0].mxu0
        %v1467 = vadd.f32 %v1359, %v1466
        %v1468 = vpop.f32.mrb[0].mxu0
        %1469 = vmatprep.mubr.f32.mxu0 0.0
        %1470 = vmatmul.mubr.f32.gmra.mrb[0].mxu0 %v1374
        %v1471 = vpop.f32.mrb[0].mxu0
        %v1472 = vadd.f32 %v1359, %v1471
        %v1473 = vpop.f32.mrb[0].mxu0
        %1474 = vmatprep.mubr.f32.mxu0 0.0
        %1475 = vmatmul.mubr.f32.gmra.mrb[0].mxu0 %v1377
        %v1476 = vpop.f32.mrb[0].mxu0
        %v1477 = vadd.f32 %v1359, %v1476
        %v1478 = vpop.f32.mrb[0].mxu0
        %1479 = vmatprep.mubr.f32.mxu0 0.0
        %1480 = vmatmul.mubr.f32.gmra.mrb[0].mxu0 %v1380
        %v1481 = vpop.f32.mrb[0].mxu0
        %v1482 = vadd.f32 %v1359, %v1481
        %v1483 = vpop.f32.mrb[0].mxu0
        %1484 = vmatprep.mubr.f32.mxu0 0.0
        %1485 = vmatmul.mubr.f32.gmra.mrb[0].mxu0 %v1383
        %v1486 = vpop.f32.mrb[0].mxu0
        %v1487 = vadd.f32 %v1359, %v1486
        %v1488 = vpop.f32.mrb[0].mxu0
        %1489 = vdwg.mxu0
        %v1490 = vmax.f32 %v1452, 0.0
        %v1491 = vmax.f32 %v1457, 0.0
        %v1492 = vmax.f32 %v1462, 0.0
        %v1493 = vmax.f32 %v1467, 0.0
        %v1494 = vmax.f32 %v1472, 0.0
        %v1495 = vmax.f32 %v1477, 0.0
        %v1496 = vmax.f32 %v1482, 0.0
        %v1497 = vmax.f32 %v1487, 0.0
        %1498 = vst [vmem:[#allocation4] sm:$0xff] 0.0
        %s1499 = scalar_lea.vmem [#allocation4], 72
        %1500 = vst [vmem:[%s1499] sm:$0xff] 0.0
        %s1501 = scalar_lea.vmem [#allocation4], 8
        %1502 = vst [vmem:[%s1501] sm:$0xff] %v1490
        %1503 = vst [vmem:[%s1501 + $0x8] sm:$0xff] %v1491
        %1504 = vst [vmem:[%s1501 + $0x10] sm:$0xff] %v1492
        %1505 = vst [vmem:[%s1501 + $0x18] sm:$0xff] %v1493
        %1506 = vst [vmem:[%s1501 + $0x20] sm:$0xff] %v1494
        %1507 = vst [vmem:[%s1501 + $0x28] sm:$0xff] %v1495
        %1508 = vst [vmem:[%s1501 + $0x30] sm:$0xff] %v1496
        %1509 = vst [vmem:[%s1501 + $0x38] sm:$0xff] %v1497
        %v1510 = vld [vmem:[#allocation4] sm:$0xff]
        %v1511 = vld [vmem:[#allocation4 + $0x8] sm:$0xff]
        %v1512 = vld [vmem:[#allocation4 + $0x10] sm:$0xff]
        %v1513 = vld [vmem:[#allocation4 + $0x18] sm:$0xff]
        %v1514 = vld [vmem:[#allocation4 + $0x20] sm:$0xff]
        %v1515 = vld [vmem:[#allocation4 + $0x28] sm:$0xff]
        %v1516 = vld [vmem:[#allocation4 + $0x30] sm:$0xff]
        %v1517 = vld [vmem:[#allocation4 + $0x38] sm:$0xff]
        %v1518 = vld [vmem:[#allocation4 + $0x40] sm:$0xff]
        %v1519 = vld [vmem:[#allocation4 + $0x48] sm:$0xff]
        %v1520 = vrot.slane %v1510, 7
        %v1521 = vrot.slane %v1511, 7
        %v1522 = vrot.slane %v1512, 7
        %v1523 = vrot.slane %v1513, 7
        %v1524 = vrot.slane %v1514, 7
        %v1525 = vrot.slane %v1515, 7
        %v1526 = vrot.slane %v1516, 7
        %v1527 = vrot.slane %v1517, 7
        %v1528 = vrot.slane %v1518, 7
        %v1529 = vrot.slane %v1519, 7
        %v1530 = vmul.f32 %v1520, %v681
        %v1531 = vmul.f32 %v1521, %v681
        %v1532 = vmul.f32 %v1522, %v681
        %v1533 = vmul.f32 %v1523, %v681
        %v1534 = vmul.f32 %v1524, %v681
        %v1535 = vmul.f32 %v1525, %v681
        %v1536 = vmul.f32 %v1526, %v681
        %v1537 = vmul.f32 %v1527, %v681
        %v1538 = vmul.f32 %v1528, %v681
        %v1539 = vmul.f32 %v1529, %v681
        %v1540 = vrot.slane %v1510, 1
        %v1541 = vrot.slane %v1511, 1
        %v1542 = vrot.slane %v1512, 1
        %v1543 = vrot.slane %v1513, 1
        %v1544 = vrot.slane %v1514, 1
        %v1545 = vrot.slane %v1515, 1
        %v1546 = vrot.slane %v1516, 1
        %v1547 = vrot.slane %v1517, 1
        %v1548 = vrot.slane %v1518, 1
        %v1549 = vrot.slane %v1519, 1
        %v1550 = vmul.f32 %v1540, %v684
        %v1551 = vmul.f32 %v1541, %v684
        %v1552 = vmul.f32 %v1542, %v684
        %v1553 = vmul.f32 %v1543, %v684
        %v1554 = vmul.f32 %v1544, %v684
        %v1555 = vmul.f32 %v1545, %v684
        %v1556 = vmul.f32 %v1546, %v684
        %v1557 = vmul.f32 %v1547, %v684
        %v1558 = vmul.f32 %v1548, %v684
        %v1559 = vmul.f32 %v1549, %v684
        %v1560 = vld [vmem:[%s11] sm:$0xff]
        %v1561 = vld [vmem:[%s11 + $0x8] sm:$0x1]
        %v1562 = vlaneseq
        %v1563 = vshrl.u32 %v1562, 7
        %v1564 = vsub.s32 0, %v1563
        %v1565 = vrot.slane %v1560, %v1564
        %v1566 = vmul.f32 %v1530, %v1565
        %v1567 = vmul.f32 %v1531, %v1565
        %v1568 = vmul.f32 %v1532, %v1565
        %v1569 = vmul.f32 %v1533, %v1565
        %v1570 = vmul.f32 %v1534, %v1565
        %v1571 = vmul.f32 %v1535, %v1565
        %v1572 = vmul.f32 %v1536, %v1565
        %v1573 = vmul.f32 %v1537, %v1565
        %v1574 = vadd.f32 %v1566, 0.0
        %v1575 = vadd.f32 %v1567, 0.0
        %v1576 = vadd.f32 %v1568, 0.0
        %v1577 = vadd.f32 %v1569, 0.0
        %v1578 = vadd.f32 %v1570, 0.0
        %v1579 = vadd.f32 %v1571, 0.0
        %v1580 = vadd.f32 %v1572, 0.0
        %v1581 = vadd.f32 %v1573, 0.0
        %v1582 = vlaneseq
        %v1583 = vshrl.u32 %v1582, 7
        %v1584 = vsub.s32 1, %v1583
        %v1585 = vrot.slane %v1560, %v1584
        %v1586 = vmul.f32 %v1510, %v1585
        %v1587 = vmul.f32 %v1511, %v1585
        %v1588 = vmul.f32 %v1512, %v1585
        %v1589 = vmul.f32 %v1513, %v1585
        %v1590 = vmul.f32 %v1514, %v1585
        %v1591 = vmul.f32 %v1515, %v1585
        %v1592 = vmul.f32 %v1516, %v1585
        %v1593 = vmul.f32 %v1517, %v1585
        %v1594 = vadd.f32 %v1574, %v1586
        %v1595 = vadd.f32 %v1575, %v1587
        %v1596 = vadd.f32 %v1576, %v1588
        %v1597 = vadd.f32 %v1577, %v1589
        %v1598 = vadd.f32 %v1578, %v1590
        %v1599 = vadd.f32 %v1579, %v1591
        %v1600 = vadd.f32 %v1580, %v1592
        %v1601 = vadd.f32 %v1581, %v1593
        %v1602 = vlaneseq
        %v1603 = vshrl.u32 %v1602, 7
        %v1604 = vsub.s32 2, %v1603
        %v1605 = vrot.slane %v1560, %v1604
        %v1606 = vmul.f32 %v1550, %v1605
        %v1607 = vmul.f32 %v1551, %v1605
        %v1608 = vmul.f32 %v1552, %v1605
        %v1609 = vmul.f32 %v1553, %v1605
        %v1610 = vmul.f32 %v1554, %v1605
        %v1611 = vmul.f32 %v1555, %v1605
        %v1612 = vmul.f32 %v1556, %v1605
        %v1613 = vmul.f32 %v1557, %v1605
        %v1614 = vadd.f32 %v1594, %v1606
        %v1615 = vadd.f32 %v1595, %v1607
        %v1616 = vadd.f32 %v1596, %v1608
        %v1617 = vadd.f32 %v1597, %v1609
        %v1618 = vadd.f32 %v1598, %v1610
        %v1619 = vadd.f32 %v1599, %v1611
        %v1620 = vadd.f32 %v1600, %v1612
        %v1621 = vadd.f32 %v1601, %v1613
        %v1622 = vlaneseq
        %v1623 = vshrl.u32 %v1622, 7
        %v1624 = vsub.s32 3, %v1623
        %v1625 = vrot.slane %v1560, %v1624
        %v1626 = vmul.f32 %v1531, %v1625
        %v1627 = vmul.f32 %v1532, %v1625
        %v1628 = vmul.f32 %v1533, %v1625
        %v1629 = vmul.f32 %v1534, %v1625
        %v1630 = vmul.f32 %v1535, %v1625
        %v1631 = vmul.f32 %v1536, %v1625
        %v1632 = vmul.f32 %v1537, %v1625
        %v1633 = vmul.f32 %v1538, %v1625
        %v1634 = vadd.f32 %v1614, %v1626
        %v1635 = vadd.f32 %v1615, %v1627
        %v1636 = vadd.f32 %v1616, %v1628
        %v1637 = vadd.f32 %v1617, %v1629
        %v1638 = vadd.f32 %v1618, %v1630
        %v1639 = vadd.f32 %v1619, %v1631
        %v1640 = vadd.f32 %v1620, %v1632
        %v1641 = vadd.f32 %v1621, %v1633
        %v1642 = vlaneseq
        %v1643 = vshrl.u32 %v1642, 7
        %v1644 = vsub.s32 4, %v1643
        %v1645 = vrot.slane %v1560, %v1644
        %v1646 = vmul.f32 %v1511, %v1645
        %v1647 = vmul.f32 %v1512, %v1645
        %v1648 = vmul.f32 %v1513, %v1645
        %v1649 = vmul.f32 %v1514, %v1645
        %v1650 = vmul.f32 %v1515, %v1645
        %v1651 = vmul.f32 %v1516, %v1645
        %v1652 = vmul.f32 %v1517, %v1645
        %v1653 = vmul.f32 %v1518, %v1645
        %v1654 = vadd.f32 %v1634, %v1646
        %v1655 = vadd.f32 %v1635, %v1647
        %v1656 = vadd.f32 %v1636, %v1648
        %v1657 = vadd.f32 %v1637, %v1649
        %v1658 = vadd.f32 %v1638, %v1650
        %v1659 = vadd.f32 %v1639, %v1651
        %v1660 = vadd.f32 %v1640, %v1652
        %v1661 = vadd.f32 %v1641, %v1653
        %v1662 = vlaneseq
        %v1663 = vshrl.u32 %v1662, 7
        %v1664 = vsub.s32 5, %v1663
        %v1665 = vrot.slane %v1560, %v1664
        %v1666 = vmul.f32 %v1551, %v1665
        %v1667 = vmul.f32 %v1552, %v1665
        %v1668 = vmul.f32 %v1553, %v1665
        %v1669 = vmul.f32 %v1554, %v1665
        %v1670 = vmul.f32 %v1555, %v1665
        %v1671 = vmul.f32 %v1556, %v1665
        %v1672 = vmul.f32 %v1557, %v1665
        %v1673 = vmul.f32 %v1558, %v1665
        %v1674 = vadd.f32 %v1654, %v1666
        %v1675 = vadd.f32 %v1655, %v1667
        %v1676 = vadd.f32 %v1656, %v1668
        %v1677 = vadd.f32 %v1657, %v1669
        %v1678 = vadd.f32 %v1658, %v1670
        %v1679 = vadd.f32 %v1659, %v1671
        %v1680 = vadd.f32 %v1660, %v1672
        %v1681 = vadd.f32 %v1661, %v1673
        %v1682 = vlaneseq
        %v1683 = vshrl.u32 %v1682, 7
        %v1684 = vsub.s32 6, %v1683
        %v1685 = vrot.slane %v1560, %v1684
        %v1686 = vmul.f32 %v1532, %v1685
        %v1687 = vmul.f32 %v1533, %v1685
        %v1688 = vmul.f32 %v1534, %v1685
        %v1689 = vmul.f32 %v1535, %v1685
        %v1690 = vmul.f32 %v1536, %v1685
        %v1691 = vmul.f32 %v1537, %v1685
        %v1692 = vmul.f32 %v1538, %v1685
        %v1693 = vmul.f32 %v1539, %v1685
        %v1694 = vadd.f32 %v1674, %v1686
        %v1695 = vadd.f32 %v1675, %v1687
        %v1696 = vadd.f32 %v1676, %v1688
        %v1697 = vadd.f32 %v1677, %v1689
        %v1698 = vadd.f32 %v1678, %v1690
        %v1699 = vadd.f32 %v1679, %v1691
        %v1700 = vadd.f32 %v1680, %v1692
        %v1701 = vadd.f32 %v1681, %v1693
        %v1702 = vlaneseq
        %v1703 = vshrl.u32 %v1702, 7
        %v1704 = vsub.s32 7, %v1703
        %v1705 = vrot.slane %v1560, %v1704
        %v1706 = vmul.f32 %v1512, %v1705
        %v1707 = vmul.f32 %v1513, %v1705
        %v1708 = vmul.f32 %v1514, %v1705
        %v1709 = vmul.f32 %v1515, %v1705
        %v1710 = vmul.f32 %v1516, %v1705
        %v1711 = vmul.f32 %v1517, %v1705
        %v1712 = vmul.f32 %v1518, %v1705
        %v1713 = vmul.f32 %v1519, %v1705
        %v1714 = vadd.f32 %v1694, %v1706
        %v1715 = vadd.f32 %v1695, %v1707
        %v1716 = vadd.f32 %v1696, %v1708
        %v1717 = vadd.f32 %v1697, %v1709
        %v1718 = vadd.f32 %v1698, %v1710
        %v1719 = vadd.f32 %v1699, %v1711
        %v1720 = vadd.f32 %v1700, %v1712
        %v1721 = vadd.f32 %v1701, %v1713
        %v1722 = vlaneseq
        %v1723 = vshrl.u32 %v1722, 7
        %v1724 = vsub.s32 0, %v1723
        %v1725 = vrot.slane %v1561, %v1724
        %v1726 = vmul.f32 %v1552, %v1725
        %v1727 = vmul.f32 %v1553, %v1725
        %v1728 = vmul.f32 %v1554, %v1725
        %v1729 = vmul.f32 %v1555, %v1725
        %v1730 = vmul.f32 %v1556, %v1725
        %v1731 = vmul.f32 %v1557, %v1725
        %v1732 = vmul.f32 %v1558, %v1725
        %v1733 = vmul.f32 %v1559, %v1725
        %v1734 = vadd.f32 %v1714, %v1726
        %v1735 = vadd.f32 %v1715, %v1727
        %v1736 = vadd.f32 %v1716, %v1728
        %v1737 = vadd.f32 %v1717, %v1729
        %v1738 = vadd.f32 %v1718, %v1730
        %v1739 = vadd.f32 %v1719, %v1731
        %v1740 = vadd.f32 %v1720, %v1732
        %v1741 = vadd.f32 %v1721, %v1733
        %v1742 = vld [vmem:[%s12] sm:$0x1]
        %v1744 = vlaneseq
        %v1745 = vshrl.u32 %v1744, 7
        %v1746 = vsub.s32 0, %v1745
        %v1747 = vrot.slane %v1742, %v1746
        %v1749 = vadd.f32 %v1734, %v1747
        %v1750 = vadd.f32 %v1735, %v1747
        %v1751 = vadd.f32 %v1736, %v1747
        %v1752 = vadd.f32 %v1737, %v1747
        %v1753 = vadd.f32 %v1738, %v1747
        %v1754 = vadd.f32 %v1739, %v1747
        %v1755 = vadd.f32 %v1740, %v1747
        %v1756 = vadd.f32 %v1741, %v1747
        %v1757 = vmax.f32 %v1749, 0.0
        %v1758 = vmax.f32 %v1750, 0.0
        %v1759 = vmax.f32 %v1751, 0.0
        %v1760 = vmax.f32 %v1752, 0.0
        %v1761 = vmax.f32 %v1753, 0.0
        %v1762 = vmax.f32 %v1754, 0.0
        %v1763 = vmax.f32 %v1755, 0.0
        %v1764 = vmax.f32 %v1756, 0.0
        %v1765 = vld [vmem:[%s13] sm:$0xff]
        %v1766 = vld [vmem:[%s13 + $0x8] sm:$0xff]
        %v1767 = vld [vmem:[%s13 + $0x10] sm:$0xff]
        %v1768 = vld [vmem:[%s13 + $0x18] sm:$0xff]
        %v1769 = vld [vmem:[%s13 + $0x20] sm:$0xff]
        %v1770 = vld [vmem:[%s13 + $0x28] sm:$0xff]
        %v1771 = vld [vmem:[%s13 + $0x30] sm:$0xff]
        %v1772 = vld [vmem:[%s13 + $0x38] sm:$0xff]
        %v1773 = vld [vmem:[%s13 + $0x40] sm:$0xff]
        %v1774 = vld [vmem:[%s13 + $0x48] sm:$0xff]
        %v1775 = vld [vmem:[%s13 + $0x50] sm:$0xff]
        %v1776 = vld [vmem:[%s13 + $0x58] sm:$0xff]
        %v1777 = vld [vmem:[%s13 + $0x60] sm:$0xff]
        %v1778 = vld [vmem:[%s13 + $0x68] sm:$0xff]
        %v1779 = vld [vmem:[%s13 + $0x70] sm:$0xff]
        %v1780 = vld [vmem:[%s13 + $0x78] sm:$0xff]
        %v1781 = vld [vmem:[%s14] sm:$0x1]
        %v1783 = vlaneseq
        %v1784 = vshrl.u32 %v1783, 7
        %v1785 = vsub.s32 0, %v1784
        %v1786 = vrot.slane %v1781, %v1785
        %1788 = vmatprep.subr.mxu0 0.0
        %1789 = vmatpush1.msra.mxu0 %v1765
        %1790 = vmatprep.subr.mxu0 0.0
        %1791 = vmatpush1.msra.mxu0 %v1766
        %1792 = vmatprep.subr.mxu0 0.0
        %1793 = vmatpush1.msra.mxu0 %v1767
        %1794 = vmatprep.subr.mxu0 0.0
        %1795 = vmatpush1.msra.mxu0 %v1768
        %1796 = vmatprep.subr.mxu0 0.0
        %1797 = vmatpush1.msra.mxu0 %v1769
        %1798 = vmatprep.subr.mxu0 0.0
        %1799 = vmatpush1.msra.mxu0 %v1770
        %1800 = vmatprep.subr.mxu0 0.0
        %1801 = vmatpush1.msra.mxu0 %v1771
        %1802 = vmatprep.subr.mxu0 0.0
        %1803 = vmatpush1.msra.mxu0 %v1772
        %1804 = vmatprep.subr.mxu0 0.0
        %1805 = vmatpush1.msra.mxu0 %v1773
        %1806 = vmatprep.subr.mxu0 0.0
        %1807 = vmatpush1.msra.mxu0 %v1774
        %1808 = vmatprep.subr.mxu0 0.0
        %1809 = vmatpush1.msra.mxu0 %v1775
        %1810 = vmatprep.subr.mxu0 0.0
        %1811 = vmatpush1.msra.mxu0 %v1776
        %1812 = vmatprep.subr.mxu0 0.0
        %1813 = vmatpush1.msra.mxu0 %v1777
        %1814 = vmatprep.subr.mxu0 0.0
        %1815 = vmatpush1.msra.mxu0 %v1778
        %1816 = vmatprep.subr.mxu0 0.0
        %1817 = vmatpush1.msra.mxu0 %v1779
        %1818 = vmatprep.subr.mxu0 0.0
        %1819 = vmatpush1.msra.mxu0 %v1780
        %1820 = vmatprep.subr.mxu0 0.0
        %1821 = vmatpush1.msra.mxu0 0.0
        %1822 = vmatprep.subr.mxu0 0.0
        %1823 = vmatpush1.msra.mxu0 0.0
        %1824 = vmatprep.subr.mxu0 0.0
        %1825 = vmatpush1.msra.mxu0 0.0
        %1826 = vmatprep.subr.mxu0 0.0
        %1827 = vmatpush1.msra.mxu0 0.0
        %1828 = vmatprep.subr.mxu0 0.0
        %1829 = vmatpush1.msra.mxu0 0.0
        %1830 = vmatprep.subr.mxu0 0.0
        %1831 = vmatpush1.msra.mxu0 0.0
        %1832 = vmatprep.subr.mxu0 0.0
        %1833 = vmatpush1.msra.mxu0 0.0
        %1834 = vmatprep.subr.mxu0 0.0
        %1835 = vmatpush1.msra.mxu0 0.0
        %1836 = vmatprep.subr.mxu0 0.0
        %1837 = vmatpush1.msra.mxu0 0.0
        %1838 = vmatprep.subr.mxu0 0.0
        %1839 = vmatpush1.msra.mxu0 0.0
        %1840 = vmatprep.subr.mxu0 0.0
        %1841 = vmatpush1.msra.mxu0 0.0
        %1842 = vmatprep.subr.mxu0 0.0
        %1843 = vmatpush1.msra.mxu0 0.0
        %1844 = vmatprep.subr.mxu0 0.0
        %1845 = vmatpush1.msra.mxu0 0.0
        %1846 = vmatprep.subr.mxu0 0.0
        %1847 = vmatpush1.msra.mxu0 0.0
        %1848 = vmatprep.subr.mxu0 0.0
        %1849 = vmatpush1.msra.mxu0 0.0
        %1850 = vmatprep.subr.mxu0 0.0
        %1851 = vmatpush1.msra.mxu0 0.0
        %1852 = vmatprep.mubr.f32.mxu0 0.0
        %1853 = vmatmul.mubr.f32.gmra.mrb[0].mxu0 %v1757
        %v1854 = vpop.f32.mrb[0].mxu0
        %v1855 = vadd.f32 %v1786, %v1854
        %v1856 = vpop.f32.mrb[0].mxu0
        %1857 = vmatprep.mubr.f32.mxu0 0.0
        %1858 = vmatmul.mubr.f32.gmra.mrb[0].mxu0 %v1758
        %v1859 = vpop.f32.mrb[0].mxu0
        %v1860 = vadd.f32 %v1786, %v1859
        %v1861 = vpop.f32.mrb[0].mxu0
        %1862 = vmatprep.mubr.f32.mxu0 0.0
        %1863 = vmatmul.mubr.f32.gmra.mrb[0].mxu0 %v1759
        %v1864 = vpop.f32.mrb[0].mxu0
        %v1865 = vadd.f32 %v1786, %v1864
        %v1866 = vpop.f32.mrb[0].mxu0
        %1867 = vmatprep.mubr.f32.mxu0 0.0
        %1868 = vmatmul.mubr.f32.gmra.mrb[0].mxu0 %v1760
        %v1869 = vpop.f32.mrb[0].mxu0
        %v1870 = vadd.f32 %v1786, %v1869
        %v1871 = vpop.f32.mrb[0].mxu0
        %1872 = vmatprep.mubr.f32.mxu0 0.0
        %1873 = vmatmul.mubr.f32.gmra.mrb[0].mxu0 %v1761
        %v1874 = vpop.f32.mrb[0].mxu0
        %v1875 = vadd.f32 %v1786, %v1874
        %v1876 = vpop.f32.mrb[0].mxu0
        %1877 = vmatprep.mubr.f32.mxu0 0.0
        %1878 = vmatmul.mubr.f32.gmra.mrb[0].mxu0 %v1762
        %v1879 = vpop.f32.mrb[0].mxu0
        %v1880 = vadd.f32 %v1786, %v1879
        %v1881 = vpop.f32.mrb[0].mxu0
        %1882 = vmatprep.mubr.f32.mxu0 0.0
        %1883 = vmatmul.mubr.f32.gmra.mrb[0].mxu0 %v1763
        %v1884 = vpop.f32.mrb[0].mxu0
        %v1885 = vadd.f32 %v1786, %v1884
        %v1886 = vpop.f32.mrb[0].mxu0
        %1887 = vmatprep.mubr.f32.mxu0 0.0
        %1888 = vmatmul.mubr.f32.gmra.mrb[0].mxu0 %v1764
        %v1889 = vpop.f32.mrb[0].mxu0
        %v1890 = vadd.f32 %v1786, %v1889
        %v1891 = vpop.f32.mrb[0].mxu0
        %1892 = vdwg.mxu0
        %v1893 = vmax.f32 %v1855, 0.0
        %v1894 = vmax.f32 %v1860, 0.0
        %v1895 = vmax.f32 %v1865, 0.0
        %v1896 = vmax.f32 %v1870, 0.0
        %v1897 = vmax.f32 %v1875, 0.0
        %v1898 = vmax.f32 %v1880, 0.0
        %v1899 = vmax.f32 %v1885, 0.0
        %v1900 = vmax.f32 %v1890, 0.0
        %1901 = vst [vmem:[%s487] sm:$0xff] %v1893
        %1902 = vst [vmem:[%s487 + $0x8] sm:$0xff] %v1894
        %1903 = vst [vmem:[%s487 + $0x10] sm:$0xff] %v1895
        %1904 = vst [vmem:[%s487 + $0x18] sm:$0xff] %v1896
        %1905 = vst [vmem:[%s487 + $0x20] sm:$0xff] %v1897
        %1906 = vst [vmem:[%s487 + $0x28] sm:$0xff] %v1898
        %1907 = vst [vmem:[%s487 + $0x30] sm:$0xff] %v1899
        %1908 = vst [vmem:[%s487 + $0x38] sm:$0xff] %v1900
        %s1909 = sand.u32 %s357, 1
        %s1910 = scalar_lea.sflag [#allocation6], %s1909
        %s1911 = sand.u32 %s357, 1
        %s1912 = smul.addr %s1911, 64
        %s1913 = scalar_lea.vmem [#allocation5], %s1912
        // Predicated region
        $region81: #{_lambda_.1} parent=79 // pred_check
          %p1914 = pneg %p367
        $region82: #{_lambda_.1} parent=79 // pred_check_branch
          %1916 = sbr.rel (%p1914) target = $region84
        $region83: #{_lambda_.1} parent=79 // pred_region
          %s1918 = ssub.s32 1024, 1024
          %1919 = vsyncadd %s1910, %s1918
          %s1920 = smul.addr %s29, 8
          %s1921 = smul.addr %s1920, 128
          %s1922 = scalar_lea.hbm %s15, %s1921
          %s1923 = sshll.u32 %s1913, 4
          %s1924 = int_to_ptr.vmem [resolvable:$true] %s1923
          %1929 = dma.vmem_to_hbm [thread:$0]  %s1924, 1024, %s1922, %s1910, 128, 128, 8
        $region84: #{_lambda_.1} parent=79 // pred_fallthru
          _
      $region80: #{_lambda_.1} parent=5 // pred_fallthru
        _
      %p1930 = scmp.le.s32.totalorder 2, %s24
      // Predicated region
      $region85: #{_lambda_.1} parent=5 // pred_check
        %p1931 = pneg %p1930
      $region86: #{_lambda_.1} parent=5 // pred_check_branch
        %1933 = sbr.rel (%p1931) target = $region88
      $region87: #{_lambda_.1} parent=5 // pred_region
        %s1934 = ssub.s32 %s24, 2
        // Predicated region
        $region89: #{_lambda_.1} parent=87 // pred_check
          %p1935 = pneg %p373
        $region90: #{_lambda_.1} parent=87 // pred_check_branch
          %1937 = sbr.rel (%p1935) target = $region92
        $region91: #{_lambda_.1} parent=87 // pred_region
          %s1938 = sand.u32 %s358, 1
          %s1939 = scalar_lea.sflag [#allocation6], %s1938
          %s1940 = sand.u32 %s358, 1
          %s1941 = smul.addr %s1940, 64
          %s1942 = scalar_lea.vmem [#allocation5], %s1941
          %1943 = dma.done %s1939, 1024
        $region92: #{_lambda_.1} parent=87 // pred_fallthru
          _
      $region88: #{_lambda_.1} parent=5 // pred_fallthru
        _
    $region6: #{_lambda_.1} parent=1 // loop_footer
      %s28 = sadd.s32 1, %s24
    $region7: #{_lambda_.1} parent=1 // loop_footer_branch
      %23 = sbr.rel target = $region3
    $region8: #{_lambda_.1} parent=1 // loop_exit
      _
    %1944 = vsyncpa [#allocation6], 1
    %s1945 = scalar_lea.sflag [#allocation6], 1
    %1946 = vsyncpa %s1945, 1

</llo_original>
